<compile_context>
chip_gen: v6e
topology: v6e:2x2x1
jax: 0.10.0
libtpu: 0.0.40
codegen_flags: <defaults>
</compile_context>

<pallas_src>
import functools

import jax
import jax.numpy as jnp
from jax import lax
from jax.experimental import pallas as pl
from jax.experimental.pallas import tpu as pltpu


def _ceil_to(x, m):
    return (x + m - 1) // m * m


# ----------------------------- Pallas kernels ------------------------------


def _gemm_bias_act_kernel(a_ref, b_ref, bias_ref, o_ref, acc_ref, *,
                          slope, apply_act):
    """K-tiled GEMM with fused bias + LeakyReLU epilogue.

    grid = (M tiles, K tiles).  acc_ref is an f32 VMEM scratch accumulator,
    zeroed at k == 0 and flushed (bias + activation + downcast) at k == last.
    """
    k = pl.program_id(1)

    @pl.when(k == 0)
    def _():
        acc_ref[...] = jnp.zeros_like(acc_ref)

    acc_ref[...] += jnp.dot(a_ref[...], b_ref[...],
                            preferred_element_type=jnp.float32)

    @pl.when(k == pl.num_programs(1) - 1)
    def _():
        y = acc_ref[...] + bias_ref[...]
        if apply_act:
            y = jnp.maximum(y, slope * y)          # LeakyReLU, slope in (0,1)
        o_ref[...] = y.astype(o_ref.dtype)


def _gemm_stats_kernel(a_ref, b_ref, o_ref, stats_ref, acc_ref):
    """Pass 1 of BN layers: K-tiled conv GEMM + per-M-tile channel statistics.

    stats_ref is a per-tile (1, 2, C) output (sum, sum-of-squares) computed
    from the f32 accumulator; the wrapper reduces the partial stats, so the M
    axis stays "parallel" (no resident cross-tile accumulator).  Zero-padded M
    rows contribute nothing; the wrapper divides by the true row count.  The
    conv output itself is stored in bf16 to halve the pass-1/pass-2 HBM
    round-trip.
    """
    k = pl.program_id(1)

    @pl.when(k == 0)
    def _():
        acc_ref[...] = jnp.zeros_like(acc_ref)

    acc_ref[...] += jnp.dot(a_ref[...], b_ref[...],
                            preferred_element_type=jnp.float32)

    @pl.when(k == pl.num_programs(1) - 1)
    def _():
        acc = acc_ref[...]
        o_ref[...] = acc.astype(o_ref.dtype)
        s = jnp.sum(acc, axis=0, keepdims=True)
        s2 = jnp.sum(acc * acc, axis=0, keepdims=True)
        stats_ref[...] = jnp.concatenate([s, s2], axis=0)[None, :, :]


def _bn_act_kernel(x_ref, scale_ref, shift_ref, o_ref, *, slope):
    """Pass 2 of BN layers: y = LeakyReLU(x * scale + shift), bf16 in/out."""
    y = x_ref[...].astype(jnp.float32) * scale_ref[...] + shift_ref[...]
    y = jnp.maximum(y, slope * y)
    o_ref[...] = y.astype(o_ref.dtype)


# --------------------------- tiling / VMEM budget ---------------------------


def _vmem_budget():
    try:
        cap = int(pltpu.get_tpu_info().vmem_capacity_bytes)
    except Exception:
        cap = 128 * 1024 * 1024                     # v5e / v6e default
    budget = min(max(cap, 64 * 1024 * 1024) // 2, 64 * 1024 * 1024)
    limit = budget + 16 * 1024 * 1024               # <= physical on v5e/v6e/v7x
    return budget, limit


def _pick_tiles(m, k, cout, out_bytes):
    """Budget-driven (TM, TK): A (2 bufs, bf16) + B (2 bufs, bf16) +
    out (2 bufs) + f32 accumulator must fit the per-generation VMEM budget."""
    budget, vmem_limit = _vmem_budget()

    tk = k
    if k > 2048:                                    # deep layers: bound K DMAs
        for cand in (2048, 1024, 512, 256, 128):
            if k % cand == 0:
                tk = cand
                break

    # NOTE: B / vector blocks have constant index maps; single-buffering them
    # (pipeline_mode=pl.Buffered(1)) would free more VMEM -- accounted at 2
    # buffers here to stay conservative.
    fixed = 2 * tk * cout * 2 + 4 * cout * 4
    per_row = 2 * tk * 2 + 2 * cout * out_bytes + cout * 4
    tm_cap = max(16, (budget - fixed) // max(per_row, 1))
    tm = int(min(1024, tm_cap, _ceil_to(m, 16)))
    tm = max(16, (tm // 16) * 16)                   # bf16 sublane packing
    return tm, tk, vmem_limit


# ------------------------------ conv wrapper -------------------------------


def _im2col_reflect_nhwc(x_nhwc, stride):
    """Reflect-pad by 1 and extract 4x4 patches -> (N*Ho*Wo, 16*Cin) in bf16.

    Patch columns are tap-major, channel-minor: col = (i*4 + j)*Cin + c.
    Done in bf16 so the materialized patches cost half the f32 HBM traffic.
    """
    x_nhwc = x_nhwc.astype(jnp.bfloat16)
    n, h, w, c = x_nhwc.shape
    xp = jnp.pad(x_nhwc, ((0, 0), (1, 1), (1, 1), (0, 0)), mode="reflect")
    ho = (h - 2) // stride + 1
    wo = (w - 2) // stride + 1
    cols = []
    for i in range(4):
        for j in range(4):
            cols.append(xp[:, i:i + stride * ho:stride,
                           j:j + stride * wo:stride, :])      # (n, ho, wo, c)
    patches = jnp.concatenate(cols, axis=-1)                  # (n, ho, wo, 16c)
    return patches.reshape(n * ho * wo, 16 * c), (n, ho, wo)


def conv4x4_pallas(x_nhwc, weight, *, stride, bias=None, bn_params=None,
                   act=True, slope=0.2, eps=1e-5, out_dtype=jnp.bfloat16):
    """4x4 reflect-padded conv (pad=1) + fused epilogue.  NHWC in / NHWC out.

    weight: PyTorch layout (Cout, Cin, 4, 4).
    bn_params: (gamma, beta) -> training-mode BatchNorm2d (batch statistics,
    biased variance, eps=1e-5); running stats are not tracked.
    """
    a, (n, ho, wo) = _im2col_reflect_nhwc(x_nhwc, stride)
    m, k = a.shape
    cout = weight.shape[0]
    # (Cout, Cin, 4, 4) -> (4, 4, Cin, Cout) -> (16*Cin, Cout): matches the
    # tap-major / channel-minor patch ordering above.
    b = weight.transpose(2, 3, 1, 0).reshape(k, cout).astype(jnp.bfloat16)

    out_bytes = jnp.dtype(out_dtype).itemsize
    tm, tk, vmem_limit = _pick_tiles(m, k, cout, out_bytes)
    mp = _ceil_to(m, tm)
    nm, nk = mp // tm, k // tk
    grid = (nm, nk)

    if mp != m:
        a = jnp.pad(a, ((0, mp - m), (0, 0)))      # zero rows: inert in GEMM/stats

    a_spec = pl.BlockSpec((tm, tk), lambda i, kk: (i, kk))
    b_spec = pl.BlockSpec((tk, cout), lambda i, kk: (kk, 0))
    vec_spec = pl.BlockSpec((1, cout), lambda i, kk: (0, 0))
    o_spec = pl.BlockSpec((tm, cout), lambda i, kk: (i, 0))
    params = pltpu.CompilerParams(
        dimension_semantics=("parallel", "arbitrary"),
        vmem_limit_bytes=vmem_limit)

    if bn_params is None:
        bias_v = (bias.astype(jnp.float32) if bias is not None
                  else jnp.zeros((cout,), jnp.float32))[None, :]
        out = pl.pallas_call(
            functools.partial(_gemm_bias_act_kernel, slope=slope,
                              apply_act=act),
            out_shape=jax.ShapeDtypeStruct((mp, cout), out_dtype),
            grid=grid,
            in_specs=[a_spec, b_spec, vec_spec],
            out_specs=o_spec,
            scratch_shapes=[pltpu.VMEM((tm, cout), jnp.float32)],
            compiler_params=params,
        )(a, b, bias_v)
    else:
        gamma, beta = bn_params
        stats_spec = pl.BlockSpec((1, 2, cout), lambda i, kk: (i, 0, 0))
        # Pass 1: conv GEMM (bf16 output) + per-tile partial statistics.
        conv_out, part_stats = pl.pallas_call(
            _gemm_stats_kernel,
            out_shape=(jax.ShapeDtypeStruct((mp, cout), out_dtype),
                       jax.ShapeDtypeStruct((nm, 2, cout), jnp.float32)),
            grid=grid,
            in_specs=[a_spec, b_spec],
            out_specs=(o_spec, stats_spec),
            scratch_shapes=[pltpu.VMEM((tm, cout), jnp.float32)],
            compiler_params=params,
        )(a, b)

        # Tiny per-channel math in plain JAX (f32).  E[x^2]-E[x]^2 is adequate
        # at these magnitudes; var is clamped to guard tiny cancellation.
        stats = jnp.sum(part_stats, axis=0)                     # (2, cout)
        mean = stats[0] / m
        var = jnp.maximum(stats[1] / m - mean * mean, 0.0)      # biased (train)
        inv = lax.rsqrt(var + eps)
        scale = gamma.astype(jnp.float32) * inv
        shift = beta.astype(jnp.float32) - mean * scale

        # Pass 2: normalize + LeakyReLU over independent ("parallel") M tiles.
        out = pl.pallas_call(
            functools.partial(_bn_act_kernel, slope=slope),
            out_shape=jax.ShapeDtypeStruct((mp, cout), out_dtype),
            grid=(nm,),
            in_specs=[pl.BlockSpec((tm, cout), lambda i: (i, 0)),
                      pl.BlockSpec((1, cout), lambda i: (0, 0)),
                      pl.BlockSpec((1, cout), lambda i: (0, 0))],
            out_specs=pl.BlockSpec((tm, cout), lambda i: (i, 0)),
            compiler_params=pltpu.CompilerParams(
                dimension_semantics=("parallel",),
                vmem_limit_bytes=vmem_limit),
        )(conv_out, scale[None, :], shift[None, :])

    return out[:m].reshape(n, ho, wo, cout)


# --------------------------------- model -----------------------------------


class DiscPallas:
    """Pallas re-implementation of Disc(in_channels, features)."""

    def __init__(self, in_channels, features, key):
        self.features = list(features)
        keys = jax.random.split(key, 2 * (len(features) + 1) + 2)
        ki = iter(keys)

        def w(cout, cin):
            return 0.05 * jax.random.normal(next(ki), (cout, cin, 4, 4),
                                            dtype=jnp.float32)

        # initial: Conv(in*2 -> features[0], s=2, bias=True) + LeakyReLU(0.2)
        self.w_init = w(features[0], in_channels * 2)
        self.b_init = 0.01 * jax.random.normal(next(ki), (features[0],),
                                               dtype=jnp.float32)

        # CNNBlocks: Conv(bias=False) + BatchNorm2d(training stats) + LeakyReLU
        self.blocks = []
        for i in range(len(features) - 1):
            stride = 1 if i == len(features) - 2 else 2
            wt = w(features[i + 1], features[i])
            gamma = jnp.ones((features[i + 1],), jnp.float32)   # BN default init
            beta = jnp.zeros((features[i + 1],), jnp.float32)
            self.blocks.append((wt, gamma, beta, stride))

        # final: Conv(features[-1] -> 1, s=1, bias=True), no activation
        self.w_final = w(1, features[-1])
        self.b_final = 0.01 * jax.random.normal(next(ki), (1,),
                                                dtype=jnp.float32)

    def __call__(self, x, y):
        # NCHW at the boundary -> NHWC + bf16 internally.
        h = jnp.concatenate([x, y], axis=1).transpose(0, 2, 3, 1)
        h = h.astype(jnp.bfloat16)
        h = conv4x4_pallas(h, self.w_init, stride=2, bias=self.b_init, act=True)
        for wt, gamma, beta, stride in self.blocks:
            h = conv4x4_pallas(h, wt, stride=stride, bn_params=(gamma, beta))
        # Final Cout=1 conv: kept out of the 128-lane GEMM path (per perf
        # review) -- a plain XLA dot over the bf16 patches, f32 accumulation.
        a, (n, ho, wo) = _im2col_reflect_nhwc(h, 1)
        wf = self.w_final.transpose(2, 3, 1, 0).reshape(-1, 1).astype(jnp.bfloat16)
        out = jnp.dot(a, wf, preferred_element_type=jnp.float32)
        out = (out + self.b_final.astype(jnp.float32)).reshape(n, ho, wo, 1)
        return out.transpose(0, 3, 1, 2)                        # back to NCHW


# ---------------------------------- main ------------------------------------

if __name__ == "__main__":
    key = jax.random.PRNGKey(0)
    k_model, kx, ky = jax.random.split(key, 3)

    in_channels = 2
    features = [8, 16, 32]
    batch, spatial = 2, 16

    model = DiscPallas(in_channels, features, k_model)

    x = jax.random.normal(kx, (batch, in_channels, spatial, spatial),
                          dtype=jnp.float32)
    y = jax.random.normal(ky, (batch, in_channels, spatial, spatial),
                          dtype=jnp.float32)

    fwd = jax.jit(lambda a, b: model(a, b))
    out = fwd(x, y)
    out = jax.block_until_ready(out)

    assert out.shape == (batch, 1, 2, 2), out.shape
    assert jnp.all(jnp.isfinite(out))
    print("KERNEL_OK")
</pallas_src>

<mosaic_0001>
module attributes {stable_mosaic.version = 11 : i64} {
  func.func @_gemm_bias_act_kernel(%arg0: i32, %arg1: i32, %arg2: memref<128x64xbf16, #tpu.memory_space<vmem>>, %arg3: memref<64x8xbf16, #tpu.memory_space<vmem>>, %arg4: memref<1x8xf32, #tpu.memory_space<vmem>>, %arg5: memref<128x8xbf16, #tpu.memory_space<vmem>>, %arg6: memref<128x8xf32, #tpu.memory_space<vmem>>) attributes {dimension_semantics = [#tpu.dimension_semantics<parallel>, #tpu.dimension_semantics<arbitrary>], iteration_bounds = array<i64: 1, 1>, scalar_prefetch = 0 : i64, scratch_operands = 1 : i64, tpu.core_type = #tpu.core_type<tc>, window_params = [{transform_indices = @transform_0, window_bounds = array<i64: 128, 64>}, {transform_indices = @transform_1, window_bounds = array<i64: 64, 8>}, {pipeline_mode = #tpu.pipeline_mode<synchronous>, transform_indices = @transform_2, window_bounds = array<i64: 1, 8>}, {transform_indices = @transform_3, window_bounds = array<i64: 128, 8>}]} {
    %c0_i32 = arith.constant 0 : i32
    %0 = arith.cmpi eq, %arg1, %c0_i32 : i32
    %1 = arith.extui %0 : i1 to i32
    %c0_i32_0 = arith.constant 0 : i32
    %2 = arith.cmpi ne, %1, %c0_i32_0 : i32
    scf.if %2 {
      %cst_10 = arith.constant 0.000000e+00 : f32
      %12 = vector.broadcast %cst_10 : f32 to vector<128x8xf32>
      %c0_11 = arith.constant 0 : index
      %c0_12 = arith.constant 0 : index
      %13 = vector.load %arg6[%c0_11, %c0_12] : memref<128x8xf32, #tpu.memory_space<vmem>>, vector<128x8xf32>
      tpu.vector_store %arg6[%c0_11, %c0_12], %12 {strides = array<i32>} : memref<128x8xf32, #tpu.memory_space<vmem>>, vector<128x8xf32>,
    } else {
    }
    %c0 = arith.constant 0 : index
    %c0_1 = arith.constant 0 : index
    %3 = vector.load %arg6[%c0, %c0_1] : memref<128x8xf32, #tpu.memory_space<vmem>>, vector<128x8xf32>
    %c0_2 = arith.constant 0 : index
    %c0_3 = arith.constant 0 : index
    %4 = vector.load %arg2[%c0_2, %c0_3] : memref<128x64xbf16, #tpu.memory_space<vmem>>, vector<128x64xbf16>
    %c0_4 = arith.constant 0 : index
    %c0_5 = arith.constant 0 : index
    %5 = vector.load %arg3[%c0_4, %c0_5] : memref<64x8xbf16, #tpu.memory_space<vmem>>, vector<64x8xbf16>
    %cst = arith.constant dense<0.000000e+00> : vector<128x8xf32>
    %6 = tpu.matmul %4, %5, %cst {dimension_numbers = #tpu.dot_dimension_numbers<[1], [0], [0], [1], [0, 0, 1, 1], [], []>} : vector<128x64xbf16>, vector<64x8xbf16>, vector<128x8xf32> -> vector<128x8xf32>
    %7 = arith.addf %3, %6 : vector<128x8xf32>
    %c0_6 = arith.constant 0 : index
    %c0_7 = arith.constant 0 : index
    %8 = vector.load %arg6[%c0_6, %c0_7] : memref<128x8xf32, #tpu.memory_space<vmem>>, vector<128x8xf32>
    tpu.vector_store %arg6[%c0_6, %c0_7], %7 {strides = array<i32>} : memref<128x8xf32, #tpu.memory_space<vmem>>, vector<128x8xf32>,
    %c0_i32_8 = arith.constant 0 : i32
    %9 = arith.cmpi eq, %arg1, %c0_i32_8 : i32
    %10 = arith.extui %9 : i1 to i32
    %c0_i32_9 = arith.constant 0 : i32
    %11 = arith.cmpi ne, %10, %c0_i32_9 : i32
    scf.if %11 {
      %c0_10 = arith.constant 0 : index
      %c0_11 = arith.constant 0 : index
      %12 = vector.load %arg6[%c0_10, %c0_11] : memref<128x8xf32, #tpu.memory_space<vmem>>, vector<128x8xf32>
      %c0_12 = arith.constant 0 : index
      %c0_13 = arith.constant 0 : index
      %13 = vector.load %arg4[%c0_12, %c0_13] : memref<1x8xf32, #tpu.memory_space<vmem>>, vector<1x8xf32>
      %14 = vector.broadcast %13 : vector<1x8xf32> to vector<128x8xf32>
      %15 = arith.addf %12, %14 : vector<128x8xf32>
      %cst_14 = arith.constant 2.000000e-01 : f32
      %16 = vector.broadcast %cst_14 : f32 to vector<128x8xf32>
      %17 = arith.mulf %16, %15 : vector<128x8xf32>
      %18 = arith.maximumf %15, %17 : vector<128x8xf32>
      %19 = arith.truncf %18 : vector<128x8xf32> to vector<128x8xbf16>
      %c0_15 = arith.constant 0 : index
      %c0_16 = arith.constant 0 : index
      %20 = vector.load %arg5[%c0_15, %c0_16] : memref<128x8xbf16, #tpu.memory_space<vmem>>, vector<128x8xbf16>
      tpu.vector_store %arg5[%c0_15, %c0_16], %19 {strides = array<i32>} : memref<128x8xbf16, #tpu.memory_space<vmem>>, vector<128x8xbf16>,
    } else {
    }
    return
  }
  func.func @transform_0(%arg0: i32, %arg1: i32) -> (i32, i32) {
    %c0_i32 = arith.constant 0 : i32
    return %arg0, %arg1 : i32, i32
  }
  func.func @transform_1(%arg0: i32, %arg1: i32) -> (i32, i32) {
    %c0_i32 = arith.constant 0 : i32
    %c0_i32_0 = arith.constant 0 : i32
    return %arg1, %c0_i32 : i32, i32
  }
  func.func @transform_2(%arg0: i32, %arg1: i32) -> (i32, i32) {
    %c0_i32 = arith.constant 0 : i32
    %c0_i32_0 = arith.constant 0 : i32
    %c0_i32_1 = arith.constant 0 : i32
    return %c0_i32, %c0_i32_0 : i32, i32
  }
  func.func @transform_3(%arg0: i32, %arg1: i32) -> (i32, i32) {
    %c0_i32 = arith.constant 0 : i32
    %c0_i32_0 = arith.constant 0 : i32
    return %arg0, %c0_i32 : i32, i32
  }
}

module attributes {stable_mosaic.version = 11 : i64} {
  func.func @_gemm_stats_kernel(%arg0: i32, %arg1: i32, %arg2: memref<32x128xbf16, #tpu.memory_space<vmem>>, %arg3: memref<128x16xbf16, #tpu.memory_space<vmem>>, %arg4: memref<32x16xbf16, #tpu.memory_space<vmem>>, %arg5: memref<1x2x16xf32, #tpu.memory_space<vmem>>, %arg6: memref<32x16xf32, #tpu.memory_space<vmem>>) attributes {dimension_semantics = [#tpu.dimension_semantics<parallel>, #tpu.dimension_semantics<arbitrary>], iteration_bounds = array<i64: 1, 1>, scalar_prefetch = 0 : i64, scratch_operands = 1 : i64, tpu.core_type = #tpu.core_type<tc>, window_params = [{transform_indices = @transform_0, window_bounds = array<i64: 32, 128>}, {transform_indices = @transform_1, window_bounds = array<i64: 128, 16>}, {transform_indices = @transform_2, window_bounds = array<i64: 32, 16>}, {transform_indices = @transform_3, window_bounds = array<i64: 1, 2, 16>}]} {
    %c0_i32 = arith.constant 0 : i32
    %0 = arith.cmpi eq, %arg1, %c0_i32 : i32
    %1 = arith.extui %0 : i1 to i32
    %c0_i32_0 = arith.constant 0 : i32
    %2 = arith.cmpi ne, %1, %c0_i32_0 : i32
    scf.if %2 {
      %cst_10 = arith.constant 0.000000e+00 : f32
      %12 = vector.broadcast %cst_10 : f32 to vector<32x16xf32>
      %c0_11 = arith.constant 0 : index
      %c0_12 = arith.constant 0 : index
      %13 = vector.load %arg6[%c0_11, %c0_12] : memref<32x16xf32, #tpu.memory_space<vmem>>, vector<32x16xf32>
      tpu.vector_store %arg6[%c0_11, %c0_12], %12 {strides = array<i32>} : memref<32x16xf32, #tpu.memory_space<vmem>>, vector<32x16xf32>,
    } else {
    }
    %c0 = arith.constant 0 : index
    %c0_1 = arith.constant 0 : index
    %3 = vector.load %arg6[%c0, %c0_1] : memref<32x16xf32, #tpu.memory_space<vmem>>, vector<32x16xf32>
    %c0_2 = arith.constant 0 : index
    %c0_3 = arith.constant 0 : index
    %4 = vector.load %arg2[%c0_2, %c0_3] : memref<32x128xbf16, #tpu.memory_space<vmem>>, vector<32x128xbf16>
    %c0_4 = arith.constant 0 : index
    %c0_5 = arith.constant 0 : index
    %5 = vector.load %arg3[%c0_4, %c0_5] : memref<128x16xbf16, #tpu.memory_space<vmem>>, vector<128x16xbf16>
    %cst = arith.constant dense<0.000000e+00> : vector<32x16xf32>
    %6 = tpu.matmul %4, %5, %cst {dimension_numbers = #tpu.dot_dimension_numbers<[1], [0], [0], [1], [0, 0, 1, 1], [], []>} : vector<32x128xbf16>, vector<128x16xbf16>, vector<32x16xf32> -> vector<32x16xf32>
    %7 = arith.addf %3, %6 : vector<32x16xf32>
    %c0_6 = arith.constant 0 : index
    %c0_7 = arith.constant 0 : index
    %8 = vector.load %arg6[%c0_6, %c0_7] : memref<32x16xf32, #tpu.memory_space<vmem>>, vector<32x16xf32>
    tpu.vector_store %arg6[%c0_6, %c0_7], %7 {strides = array<i32>} : memref<32x16xf32, #tpu.memory_space<vmem>>, vector<32x16xf32>,
    %c0_i32_8 = arith.constant 0 : i32
    %9 = arith.cmpi eq, %arg1, %c0_i32_8 : i32
    %10 = arith.extui %9 : i1 to i32
    %c0_i32_9 = arith.constant 0 : i32
    %11 = arith.cmpi ne, %10, %c0_i32_9 : i32
    scf.if %11 {
      %c0_10 = arith.constant 0 : index
      %c0_11 = arith.constant 0 : index
      %12 = vector.load %arg6[%c0_10, %c0_11] : memref<32x16xf32, #tpu.memory_space<vmem>>, vector<32x16xf32>
      %13 = arith.truncf %12 : vector<32x16xf32> to vector<32x16xbf16>
      %c0_12 = arith.constant 0 : index
      %c0_13 = arith.constant 0 : index
      %14 = vector.load %arg4[%c0_12, %c0_13] : memref<32x16xbf16, #tpu.memory_space<vmem>>, vector<32x16xbf16>
      tpu.vector_store %arg4[%c0_12, %c0_13], %13 {strides = array<i32>} : memref<32x16xbf16, #tpu.memory_space<vmem>>, vector<32x16xbf16>,
      %cst_14 = arith.constant dense<0.000000e+00> : vector<16xf32>
      %15 = vector.multi_reduction <add>, %12, %cst_14 [0] : vector<32x16xf32> to vector<16xf32>
      %16 = vector.shape_cast %15 : vector<16xf32> to vector<1x16xf32>
      %17 = arith.mulf %12, %12 : vector<32x16xf32>
      %cst_15 = arith.constant dense<0.000000e+00> : vector<16xf32>
      %18 = vector.multi_reduction <add>, %17, %cst_15 [0] : vector<32x16xf32> to vector<16xf32>
      %19 = vector.shape_cast %18 : vector<16xf32> to vector<1x16xf32>
      %20 = tpu.concatenate %16, %19 in 0 : vector<1x16xf32>, vector<1x16xf32> -> vector<2x16xf32>
      %21 = vector.shape_cast %20 : vector<2x16xf32> to vector<1x2x16xf32>
      %c0_16 = arith.constant 0 : index
      %c0_17 = arith.constant 0 : index
      %c0_18 = arith.constant 0 : index
      %22 = vector.load %arg5[%c0_16, %c0_17, %c0_18] : memref<1x2x16xf32, #tpu.memory_space<vmem>>, vector<1x2x16xf32>
      tpu.vector_store %arg5[%c0_16, %c0_17, %c0_18], %21 {strides = array<i32>} : memref<1x2x16xf32, #tpu.memory_space<vmem>>, vector<1x2x16xf32>,
    } else {
    }
    return
  }
  func.func @transform_0(%arg0: i32, %arg1: i32) -> (i32, i32) {
    %c0_i32 = arith.constant 0 : i32
    return %arg0, %arg1 : i32, i32
  }
  func.func @transform_1(%arg0: i32, %arg1: i32) -> (i32, i32) {
    %c0_i32 = arith.constant 0 : i32
    %c0_i32_0 = arith.constant 0 : i32
    return %arg1, %c0_i32 : i32, i32
  }
  func.func @transform_2(%arg0: i32, %arg1: i32) -> (i32, i32) {
    %c0_i32 = arith.constant 0 : i32
    %c0_i32_0 = arith.constant 0 : i32
    return %arg0, %c0_i32 : i32, i32
  }
  func.func @transform_3(%arg0: i32, %arg1: i32) -> (i32, i32, i32) {
    %c0_i32 = arith.constant 0 : i32
    %c0_i32_0 = arith.constant 0 : i32
    %c0_i32_1 = arith.constant 0 : i32
    return %arg0, %c0_i32, %c0_i32_0 : i32, i32, i32
  }
}

module attributes {stable_mosaic.version = 11 : i64} {
  func.func @_bn_act_kernel(%arg0: i32, %arg1: memref<32x16xbf16, #tpu.memory_space<vmem>>, %arg2: memref<1x16xf32, #tpu.memory_space<vmem>>, %arg3: memref<1x16xf32, #tpu.memory_space<vmem>>, %arg4: memref<32x16xbf16, #tpu.memory_space<vmem>>) attributes {dimension_semantics = [#tpu.dimension_semantics<parallel>], iteration_bounds = array<i64: 1>, scalar_prefetch = 0 : i64, scratch_operands = 0 : i64, tpu.core_type = #tpu.core_type<tc>, window_params = [{transform_indices = @transform_0, window_bounds = array<i64: 32, 16>}, {pipeline_mode = #tpu.pipeline_mode<synchronous>, transform_indices = @transform_1, window_bounds = array<i64: 1, 16>}, {pipeline_mode = #tpu.pipeline_mode<synchronous>, transform_indices = @transform_2, window_bounds = array<i64: 1, 16>}, {transform_indices = @transform_3, window_bounds = array<i64: 32, 16>}]} {
    %c0 = arith.constant 0 : index
    %c0_0 = arith.constant 0 : index
    %0 = vector.load %arg1[%c0, %c0_0] : memref<32x16xbf16, #tpu.memory_space<vmem>>, vector<32x16xbf16>
    %1 = arith.extf %0 : vector<32x16xbf16> to vector<32x16xf32>
    %c0_1 = arith.constant 0 : index
    %c0_2 = arith.constant 0 : index
    %2 = vector.load %arg2[%c0_1, %c0_2] : memref<1x16xf32, #tpu.memory_space<vmem>>, vector<1x16xf32>
    %3 = vector.broadcast %2 : vector<1x16xf32> to vector<32x16xf32>
    %4 = arith.mulf %1, %3 : vector<32x16xf32>
    %c0_3 = arith.constant 0 : index
    %c0_4 = arith.constant 0 : index
    %5 = vector.load %arg3[%c0_3, %c0_4] : memref<1x16xf32, #tpu.memory_space<vmem>>, vector<1x16xf32>
    %6 = vector.broadcast %5 : vector<1x16xf32> to vector<32x16xf32>
    %7 = arith.addf %4, %6 : vector<32x16xf32>
    %cst = arith.constant 2.000000e-01 : f32
    %8 = vector.broadcast %cst : f32 to vector<32x16xf32>
    %9 = arith.mulf %8, %7 : vector<32x16xf32>
    %10 = arith.maximumf %7, %9 : vector<32x16xf32>
    %11 = arith.truncf %10 : vector<32x16xf32> to vector<32x16xbf16>
    %c0_5 = arith.constant 0 : index
    %c0_6 = arith.constant 0 : index
    %12 = vector.load %arg4[%c0_5, %c0_6] : memref<32x16xbf16, #tpu.memory_space<vmem>>, vector<32x16xbf16>
    tpu.vector_store %arg4[%c0_5, %c0_6], %11 {strides = array<i32>} : memref<32x16xbf16, #tpu.memory_space<vmem>>, vector<32x16xbf16>,
    return
  }
  func.func @transform_0(%arg0: i32) -> (i32, i32) {
    %c0_i32 = arith.constant 0 : i32
    %c0_i32_0 = arith.constant 0 : i32
    return %arg0, %c0_i32 : i32, i32
  }
  func.func @transform_1(%arg0: i32) -> (i32, i32) {
    %c0_i32 = arith.constant 0 : i32
    %c0_i32_0 = arith.constant 0 : i32
    %c0_i32_1 = arith.constant 0 : i32
    return %c0_i32, %c0_i32_0 : i32, i32
  }
  func.func @transform_2(%arg0: i32) -> (i32, i32) {
    %c0_i32 = arith.constant 0 : i32
    %c0_i32_0 = arith.constant 0 : i32
    %c0_i32_1 = arith.constant 0 : i32
    return %c0_i32, %c0_i32_0 : i32, i32
  }
  func.func @transform_3(%arg0: i32) -> (i32, i32) {
    %c0_i32 = arith.constant 0 : i32
    %c0_i32_0 = arith.constant 0 : i32
    return %arg0, %c0_i32 : i32, i32
  }
}

module attributes {stable_mosaic.version = 11 : i64} {
  func.func @_gemm_stats_kernel(%arg0: i32, %arg1: i32, %arg2: memref<32x256xbf16, #tpu.memory_space<vmem>>, %arg3: memref<256x32xbf16, #tpu.memory_space<vmem>>, %arg4: memref<32x32xbf16, #tpu.memory_space<vmem>>, %arg5: memref<1x2x32xf32, #tpu.memory_space<vmem>>, %arg6: memref<32x32xf32, #tpu.memory_space<vmem>>) attributes {dimension_semantics = [#tpu.dimension_semantics<parallel>, #tpu.dimension_semantics<arbitrary>], iteration_bounds = array<i64: 1, 1>, scalar_prefetch = 0 : i64, scratch_operands = 1 : i64, tpu.core_type = #tpu.core_type<tc>, window_params = [{transform_indices = @transform_0, window_bounds = array<i64: 32, 256>}, {transform_indices = @transform_1, window_bounds = array<i64: 256, 32>}, {transform_indices = @transform_2, window_bounds = array<i64: 32, 32>}, {transform_indices = @transform_3, window_bounds = array<i64: 1, 2, 32>}]} {
    %c0_i32 = arith.constant 0 : i32
    %0 = arith.cmpi eq, %arg1, %c0_i32 : i32
    %1 = arith.extui %0 : i1 to i32
    %c0_i32_0 = arith.constant 0 : i32
    %2 = arith.cmpi ne, %1, %c0_i32_0 : i32
    scf.if %2 {
      %cst_10 = arith.constant 0.000000e+00 : f32
      %12 = vector.broadcast %cst_10 : f32 to vector<32x32xf32>
      %c0_11 = arith.constant 0 : index
      %c0_12 = arith.constant 0 : index
      %13 = vector.load %arg6[%c0_11, %c0_12] : memref<32x32xf32, #tpu.memory_space<vmem>>, vector<32x32xf32>
      tpu.vector_store %arg6[%c0_11, %c0_12], %12 {strides = array<i32>} : memref<32x32xf32, #tpu.memory_space<vmem>>, vector<32x32xf32>,
    } else {
    }
    %c0 = arith.constant 0 : index
    %c0_1 = arith.constant 0 : index
    %3 = vector.load %arg6[%c0, %c0_1] : memref<32x32xf32, #tpu.memory_space<vmem>>, vector<32x32xf32>
    %c0_2 = arith.constant 0 : index
    %c0_3 = arith.constant 0 : index
    %4 = vector.load %arg2[%c0_2, %c0_3] : memref<32x256xbf16, #tpu.memory_space<vmem>>, vector<32x256xbf16>
    %c0_4 = arith.constant 0 : index
    %c0_5 = arith.constant 0 : index
    %5 = vector.load %arg3[%c0_4, %c0_5] : memref<256x32xbf16, #tpu.memory_space<vmem>>, vector<256x32xbf16>
    %cst = arith.constant dense<0.000000e+00> : vector<32x32xf32>
    %6 = tpu.matmul %4, %5, %cst {dimension_numbers = #tpu.dot_dimension_numbers<[1], [0], [0], [1], [0, 0, 1, 1], [], []>} : vector<32x256xbf16>, vector<256x32xbf16>, vector<32x32xf32> -> vector<32x32xf32>
    %7 = arith.addf %3, %6 : vector<32x32xf32>
    %c0_6 = arith.constant 0 : index
    %c0_7 = arith.constant 0 : index
    %8 = vector.load %arg6[%c0_6, %c0_7] : memref<32x32xf32, #tpu.memory_space<vmem>>, vector<32x32xf32>
    tpu.vector_store %arg6[%c0_6, %c0_7], %7 {strides = array<i32>} : memref<32x32xf32, #tpu.memory_space<vmem>>, vector<32x32xf32>,
    %c0_i32_8 = arith.constant 0 : i32
    %9 = arith.cmpi eq, %arg1, %c0_i32_8 : i32
    %10 = arith.extui %9 : i1 to i32
    %c0_i32_9 = arith.constant 0 : i32
    %11 = arith.cmpi ne, %10, %c0_i32_9 : i32
    scf.if %11 {
      %c0_10 = arith.constant 0 : index
      %c0_11 = arith.constant 0 : index
      %12 = vector.load %arg6[%c0_10, %c0_11] : memref<32x32xf32, #tpu.memory_space<vmem>>, vector<32x32xf32>
      %13 = arith.truncf %12 : vector<32x32xf32> to vector<32x32xbf16>
      %c0_12 = arith.constant 0 : index
      %c0_13 = arith.constant 0 : index
      %14 = vector.load %arg4[%c0_12, %c0_13] : memref<32x32xbf16, #tpu.memory_space<vmem>>, vector<32x32xbf16>
      tpu.vector_store %arg4[%c0_12, %c0_13], %13 {strides = array<i32>} : memref<32x32xbf16, #tpu.memory_space<vmem>>, vector<32x32xbf16>,
      %cst_14 = arith.constant dense<0.000000e+00> : vector<32xf32>
      %15 = vector.multi_reduction <add>, %12, %cst_14 [0] : vector<32x32xf32> to vector<32xf32>
      %16 = vector.shape_cast %15 : vector<32xf32> to vector<1x32xf32>
      %17 = arith.mulf %12, %12 : vector<32x32xf32>
      %cst_15 = arith.constant dense<0.000000e+00> : vector<32xf32>
      %18 = vector.multi_reduction <add>, %17, %cst_15 [0] : vector<32x32xf32> to vector<32xf32>
      %19 = vector.shape_cast %18 : vector<32xf32> to vector<1x32xf32>
      %20 = tpu.concatenate %16, %19 in 0 : vector<1x32xf32>, vector<1x32xf32> -> vector<2x32xf32>
      %21 = vector.shape_cast %20 : vector<2x32xf32> to vector<1x2x32xf32>
      %c0_16 = arith.constant 0 : index
      %c0_17 = arith.constant 0 : index
      %c0_18 = arith.constant 0 : index
      %22 = vector.load %arg5[%c0_16, %c0_17, %c0_18] : memref<1x2x32xf32, #tpu.memory_space<vmem>>, vector<1x2x32xf32>
      tpu.vector_store %arg5[%c0_16, %c0_17, %c0_18], %21 {strides = array<i32>} : memref<1x2x32xf32, #tpu.memory_space<vmem>>, vector<1x2x32xf32>,
    } else {
    }
    return
  }
  func.func @transform_0(%arg0: i32, %arg1: i32) -> (i32, i32) {
    %c0_i32 = arith.constant 0 : i32
    return %arg0, %arg1 : i32, i32
  }
  func.func @transform_1(%arg0: i32, %arg1: i32) -> (i32, i32) {
    %c0_i32 = arith.constant 0 : i32
    %c0_i32_0 = arith.constant 0 : i32
    return %arg1, %c0_i32 : i32, i32
  }
  func.func @transform_2(%arg0: i32, %arg1: i32) -> (i32, i32) {
    %c0_i32 = arith.constant 0 : i32
    %c0_i32_0 = arith.constant 0 : i32
    return %arg0, %c0_i32 : i32, i32
  }
  func.func @transform_3(%arg0: i32, %arg1: i32) -> (i32, i32, i32) {
    %c0_i32 = arith.constant 0 : i32
    %c0_i32_0 = arith.constant 0 : i32
    %c0_i32_1 = arith.constant 0 : i32
    return %arg0, %c0_i32, %c0_i32_0 : i32, i32, i32
  }
}

module attributes {stable_mosaic.version = 11 : i64} {
  func.func @_bn_act_kernel(%arg0: i32, %arg1: memref<32x32xbf16, #tpu.memory_space<vmem>>, %arg2: memref<1x32xf32, #tpu.memory_space<vmem>>, %arg3: memref<1x32xf32, #tpu.memory_space<vmem>>, %arg4: memref<32x32xbf16, #tpu.memory_space<vmem>>) attributes {dimension_semantics = [#tpu.dimension_semantics<parallel>], iteration_bounds = array<i64: 1>, scalar_prefetch = 0 : i64, scratch_operands = 0 : i64, tpu.core_type = #tpu.core_type<tc>, window_params = [{transform_indices = @transform_0, window_bounds = array<i64: 32, 32>}, {pipeline_mode = #tpu.pipeline_mode<synchronous>, transform_indices = @transform_1, window_bounds = array<i64: 1, 32>}, {pipeline_mode = #tpu.pipeline_mode<synchronous>, transform_indices = @transform_2, window_bounds = array<i64: 1, 32>}, {transform_indices = @transform_3, window_bounds = array<i64: 32, 32>}]} {
    %c0 = arith.constant 0 : index
    %c0_0 = arith.constant 0 : index
    %0 = vector.load %arg1[%c0, %c0_0] : memref<32x32xbf16, #tpu.memory_space<vmem>>, vector<32x32xbf16>
    %1 = arith.extf %0 : vector<32x32xbf16> to vector<32x32xf32>
    %c0_1 = arith.constant 0 : index
    %c0_2 = arith.constant 0 : index
    %2 = vector.load %arg2[%c0_1, %c0_2] : memref<1x32xf32, #tpu.memory_space<vmem>>, vector<1x32xf32>
    %3 = vector.broadcast %2 : vector<1x32xf32> to vector<32x32xf32>
    %4 = arith.mulf %1, %3 : vector<32x32xf32>
    %c0_3 = arith.constant 0 : index
    %c0_4 = arith.constant 0 : index
    %5 = vector.load %arg3[%c0_3, %c0_4] : memref<1x32xf32, #tpu.memory_space<vmem>>, vector<1x32xf32>
    %6 = vector.broadcast %5 : vector<1x32xf32> to vector<32x32xf32>
    %7 = arith.addf %4, %6 : vector<32x32xf32>
    %cst = arith.constant 2.000000e-01 : f32
    %8 = vector.broadcast %cst : f32 to vector<32x32xf32>
    %9 = arith.mulf %8, %7 : vector<32x32xf32>
    %10 = arith.maximumf %7, %9 : vector<32x32xf32>
    %11 = arith.truncf %10 : vector<32x32xf32> to vector<32x32xbf16>
    %c0_5 = arith.constant 0 : index
    %c0_6 = arith.constant 0 : index
    %12 = vector.load %arg4[%c0_5, %c0_6] : memref<32x32xbf16, #tpu.memory_space<vmem>>, vector<32x32xbf16>
    tpu.vector_store %arg4[%c0_5, %c0_6], %11 {strides = array<i32>} : memref<32x32xbf16, #tpu.memory_space<vmem>>, vector<32x32xbf16>,
    return
  }
  func.func @transform_0(%arg0: i32) -> (i32, i32) {
    %c0_i32 = arith.constant 0 : i32
    %c0_i32_0 = arith.constant 0 : i32
    return %arg0, %c0_i32 : i32, i32
  }
  func.func @transform_1(%arg0: i32) -> (i32, i32) {
    %c0_i32 = arith.constant 0 : i32
    %c0_i32_0 = arith.constant 0 : i32
    %c0_i32_1 = arith.constant 0 : i32
    return %c0_i32, %c0_i32_0 : i32, i32
  }
  func.func @transform_2(%arg0: i32) -> (i32, i32) {
    %c0_i32 = arith.constant 0 : i32
    %c0_i32_0 = arith.constant 0 : i32
    %c0_i32_1 = arith.constant 0 : i32
    return %c0_i32, %c0_i32_0 : i32, i32
  }
  func.func @transform_3(%arg0: i32) -> (i32, i32) {
    %c0_i32 = arith.constant 0 : i32
    %c0_i32_0 = arith.constant 0 : i32
    return %arg0, %c0_i32 : i32, i32
  }
}

</mosaic_0001>

<llo_original>
// kernel: _lambda_.5
$region0: #{_lambda_.5}
  #allocation0 [shape = 'u32[]', space=smem, size = 0x4, offset = 0x4, fixed_abs, tag = 'smem constant byte address 0x4 - core index']
  #allocation1 [shape = 'u32[144,128]{1,0:T(1,128)}', space=vmem, size = 0x12000, scoped, tag = 'internal scratch']
  #allocation2 [shape = 'f32[128,8]{1,0:T(8,128)}', space=vmem, size = 0x10000, scoped, tag = 'scratch operand']
  %s0 = inlined_call_operand.vmem [shape: bf16[128,64], index: 0, kind: input, shape index: {}]
  %s1 = inlined_call_operand.vmem [shape: bf16[64,8], index: 1, kind: input, shape index: {}]
  %s2 = inlined_call_operand.vmem [shape: f32[1,8], index: 2, kind: input, shape index: {}]
  %s3 = inlined_call_operand.vmem [shape: bf16[128,8], index: 3, kind: output, shape index: {}]
  %s4 = sld [smem:[#allocation0]]
  $region30: #{_lambda_.5} parent=0
    _
  %s6 = ssub.s32 1, %s4
  %s7 = scalar_select 0, %s6, %s4
  // Predicated region
  $region2: #{_lambda_.5} parent=0 // pred_check
    _
  $region3: #{_lambda_.5} parent=0 // pred_check_branch
    %9 = sbr.rel (0) target = $region5
  $region4: #{_lambda_.5} parent=0 // pred_region
    _
  $region5: #{_lambda_.5} parent=0 // pred_fallthru
    _
  // Predicated region
  $region6: #{_lambda_.5} parent=0 // pred_check
    _
  $region7: #{_lambda_.5} parent=0 // pred_check_branch
    %11 = sbr.rel (0) target = $region9
  $region8: #{_lambda_.5} parent=0 // pred_region
    _
  $region9: #{_lambda_.5} parent=0 // pred_fallthru
    _
  // Predicated region
  $region10: #{_lambda_.5} parent=0 // pred_check
    _
  $region11: #{_lambda_.5} parent=0 // pred_check_branch
    %13 = sbr.rel (0) target = $region13
  $region12: #{_lambda_.5} parent=0 // pred_region
    _
  $region13: #{_lambda_.5} parent=0 // pred_fallthru
    _
  %p15 = scmp.eq.s32.totalorder 0, 0
  // Predicated region
  $region14: #{_lambda_.5} parent=0 // pred_check
    %p16 = pneg %p15
  $region15: #{_lambda_.5} parent=0 // pred_check_branch
    %18 = sbr.rel (%p16) target = $region17
  $region16: #{_lambda_.5} parent=0 // pred_region
    %vm19 = vcmask 64512
    %20 = vst.msk [vmem:[#allocation2] sm:$0xff] %vm19, 0.0
    %21 = vst.msk [vmem:[#allocation2 + $0x8] sm:$0xff] %vm19, 0.0
    %22 = vst.msk [vmem:[#allocation2 + $0x10] sm:$0xff] %vm19, 0.0
    %23 = vst.msk [vmem:[#allocation2 + $0x18] sm:$0xff] %vm19, 0.0
    %24 = vst.msk [vmem:[#allocation2 + $0x20] sm:$0xff] %vm19, 0.0
    %25 = vst.msk [vmem:[#allocation2 + $0x28] sm:$0xff] %vm19, 0.0
    %26 = vst.msk [vmem:[#allocation2 + $0x30] sm:$0xff] %vm19, 0.0
    %27 = vst.msk [vmem:[#allocation2 + $0x38] sm:$0xff] %vm19, 0.0
    %28 = vst.msk [vmem:[#allocation2 + $0x40] sm:$0xff] %vm19, 0.0
    %29 = vst.msk [vmem:[#allocation2 + $0x48] sm:$0xff] %vm19, 0.0
    %30 = vst.msk [vmem:[#allocation2 + $0x50] sm:$0xff] %vm19, 0.0
    %31 = vst.msk [vmem:[#allocation2 + $0x58] sm:$0xff] %vm19, 0.0
    %32 = vst.msk [vmem:[#allocation2 + $0x60] sm:$0xff] %vm19, 0.0
    %33 = vst.msk [vmem:[#allocation2 + $0x68] sm:$0xff] %vm19, 0.0
    %34 = vst.msk [vmem:[#allocation2 + $0x70] sm:$0xff] %vm19, 0.0
    %35 = vst.msk [vmem:[#allocation2 + $0x78] sm:$0xff] %vm19, 0.0
  $region17: #{_lambda_.5} parent=0 // pred_fallthru
    _
  %v36 = vld [vmem:[#allocation2] sm:$0xff]
  %v37 = vld [vmem:[#allocation2 + $0x8] sm:$0xff]
  %v38 = vld [vmem:[#allocation2 + $0x10] sm:$0xff]
  %v39 = vld [vmem:[#allocation2 + $0x18] sm:$0xff]
  %v40 = vld [vmem:[#allocation2 + $0x20] sm:$0xff]
  %v41 = vld [vmem:[#allocation2 + $0x28] sm:$0xff]
  %v42 = vld [vmem:[#allocation2 + $0x30] sm:$0xff]
  %v43 = vld [vmem:[#allocation2 + $0x38] sm:$0xff]
  %v44 = vld [vmem:[#allocation2 + $0x40] sm:$0xff]
  %v45 = vld [vmem:[#allocation2 + $0x48] sm:$0xff]
  %v46 = vld [vmem:[#allocation2 + $0x50] sm:$0xff]
  %v47 = vld [vmem:[#allocation2 + $0x58] sm:$0xff]
  %v48 = vld [vmem:[#allocation2 + $0x60] sm:$0xff]
  %v49 = vld [vmem:[#allocation2 + $0x68] sm:$0xff]
  %v50 = vld [vmem:[#allocation2 + $0x70] sm:$0xff]
  %v51 = vld [vmem:[#allocation2 + $0x78] sm:$0xff]
  %v52 = vld [vmem:[%s0] sm:$0xf]
  %v53 = vld [vmem:[%s0 + $0x4] sm:$0xf]
  %v54 = vld [vmem:[%s0 + $0x8] sm:$0xf]
  %v55 = vld [vmem:[%s0 + $0xc] sm:$0xf]
  %v56 = vld [vmem:[%s0 + $0x10] sm:$0xf]
  %v57 = vld [vmem:[%s0 + $0x14] sm:$0xf]
  %v58 = vld [vmem:[%s0 + $0x18] sm:$0xf]
  %v59 = vld [vmem:[%s0 + $0x1c] sm:$0xf]
  %v60 = vld [vmem:[%s0 + $0x20] sm:$0xf]
  %v61 = vld [vmem:[%s0 + $0x24] sm:$0xf]
  %v62 = vld [vmem:[%s0 + $0x28] sm:$0xf]
  %v63 = vld [vmem:[%s0 + $0x2c] sm:$0xf]
  %v64 = vld [vmem:[%s0 + $0x30] sm:$0xf]
  %v65 = vld [vmem:[%s0 + $0x34] sm:$0xf]
  %v66 = vld [vmem:[%s0 + $0x38] sm:$0xf]
  %v67 = vld [vmem:[%s0 + $0x3c] sm:$0xf]
  %v68 = vld [vmem:[%s1] sm:$0xf]
  %v69 = vld [vmem:[%s1 + $0x4] sm:$0xf]
  %v70 = vld [vmem:[%s1 + $0x8] sm:$0xf]
  %v71 = vld [vmem:[%s1 + $0xc] sm:$0xf]
  %v72 = vld [vmem:[%s1 + $0x10] sm:$0xf]
  %v73 = vld [vmem:[%s1 + $0x14] sm:$0xf]
  %v74 = vld [vmem:[%s1 + $0x18] sm:$0xf]
  %v75 = vld [vmem:[%s1 + $0x1c] sm:$0xf]
  %v92 = vunpack.c.l.b16 %v52
  %v93 = vunpack.c.l.b16 %v53
  %v94 = vunpack.c.l.b16 %v54
  %v95 = vunpack.c.l.b16 %v55
  %v96 = vunpack.c.l.b16 %v56
  %v97 = vunpack.c.l.b16 %v57
  %v98 = vunpack.c.l.b16 %v58
  %v99 = vunpack.c.l.b16 %v59
  %v100 = vunpack.c.l.b16 %v60
  %v101 = vunpack.c.l.b16 %v61
  %v102 = vunpack.c.l.b16 %v62
  %v103 = vunpack.c.l.b16 %v63
  %v104 = vunpack.c.l.b16 %v64
  %v105 = vunpack.c.l.b16 %v65
  %v106 = vunpack.c.l.b16 %v66
  %v107 = vunpack.c.l.b16 %v67
  %v108 = vpack.c.b16 %v93, %v92
  %v109 = vpack.c.b16 %v95, %v94
  %v110 = vpack.c.b16 %v97, %v96
  %v111 = vpack.c.b16 %v99, %v98
  %v112 = vpack.c.b16 %v101, %v100
  %v113 = vpack.c.b16 %v103, %v102
  %v114 = vpack.c.b16 %v105, %v104
  %v115 = vpack.c.b16 %v107, %v106
  %v124 = vunpack.c.l.b16 %v68
  %v125 = vunpack.c.l.b16 %v69
  %v126 = vunpack.c.l.b16 %v70
  %v127 = vunpack.c.l.b16 %v71
  %v128 = vunpack.c.l.b16 %v72
  %v129 = vunpack.c.l.b16 %v73
  %v130 = vunpack.c.l.b16 %v74
  %v131 = vunpack.c.l.b16 %v75
  %v132 = vpack.c.b16 %v125, %v124
  %v133 = vpack.c.b16 %v127, %v126
  %v134 = vpack.c.b16 %v129, %v128
  %v135 = vpack.c.b16 %v131, %v130
  %vm140 = vcmask 523264
  %v142 = vsel %vm140, %v108, 0
  %v145 = vsel %vm140, %v109, 0
  %v148 = vsel %vm140, %v110, 0
  %v151 = vsel %vm140, %v111, 0
  %v154 = vsel %vm140, %v112, 0
  %v157 = vsel %vm140, %v113, 0
  %v160 = vsel %vm140, %v114, 0
  %v163 = vsel %vm140, %v115, 0
  %165 = vmatprep.subr.bf16.mxu0 0
  %166 = vmatpush1.bf16.msra.mxu0 0
  %167 = vmatprep.subr.bf16.mxu0 0
  %168 = vmatpush1.bf16.msra.mxu0 0
  %169 = vmatprep.subr.bf16.mxu0 0
  %170 = vmatpush1.bf16.msra.mxu0 0
  %171 = vmatprep.subr.bf16.mxu0 0
  %172 = vmatpush1.bf16.msra.mxu0 0
  %173 = vmatprep.subr.bf16.mxu0 0
  %174 = vmatpush1.bf16.msra.mxu0 %v135
  %175 = vmatprep.subr.bf16.mxu0 0
  %176 = vmatpush1.bf16.msra.mxu0 %v134
  %177 = vmatprep.subr.bf16.mxu0 0
  %178 = vmatpush1.bf16.msra.mxu0 %v133
  %179 = vmatprep.subr.bf16.mxu0 0
  %180 = vmatpush1.bf16.msra.mxu0 %v132
  %181 = vmatprep.subr.bf16.mxu0 0
  %182 = vmatpush2.bf16.msra.mxu0 0
  %183 = vmatprep.subr.bf16.mxu0 0
  %184 = vmatpush2.bf16.msra.mxu0 0
  %185 = vmatprep.subr.bf16.mxu0 0
  %186 = vmatpush2.bf16.msra.mxu0 0
  %187 = vmatprep.subr.bf16.mxu0 0
  %188 = vmatpush2.bf16.msra.mxu0 0
  %189 = vmatprep.subr.bf16.mxu0 0
  %190 = vmatpush2.bf16.msra.mxu0 0
  %191 = vmatprep.subr.bf16.mxu0 0
  %192 = vmatpush2.bf16.msra.mxu0 0
  %193 = vmatprep.subr.bf16.mxu0 0
  %194 = vmatpush2.bf16.msra.mxu0 0
  %195 = vmatprep.subr.bf16.mxu0 0
  %196 = vmatpush2.bf16.msra.mxu0 0
  %197 = vmatprep.mubr.bf16.mxu0 0
  %198 = vmatmul.mubr.bf16.gmra.mxu0 %v142
  %v199 = vpop.f32.mrf.mxu0
  %v200 = vadd.f32 0.0, %v199
  %v201 = vpop.f32.mrf.mxu0
  %v202 = vpop.f32.mrf.mxu0
  %v203 = vadd.f32 0.0, %v202
  %v204 = vpop.f32.mrf.mxu0
  %205 = vmatprep.mubr.bf16.mxu0 0
  %206 = vmatmul.mubr.bf16.gmra.mxu0 %v145
  %v207 = vpop.f32.mrf.mxu0
  %v208 = vadd.f32 0.0, %v207
  %v209 = vpop.f32.mrf.mxu0
  %v210 = vpop.f32.mrf.mxu0
  %v211 = vadd.f32 0.0, %v210
  %v212 = vpop.f32.mrf.mxu0
  %213 = vmatprep.mubr.bf16.mxu0 0
  %214 = vmatmul.mubr.bf16.gmra.mxu0 %v148
  %v215 = vpop.f32.mrf.mxu0
  %v216 = vadd.f32 0.0, %v215
  %v217 = vpop.f32.mrf.mxu0
  %v218 = vpop.f32.mrf.mxu0
  %v219 = vadd.f32 0.0, %v218
  %v220 = vpop.f32.mrf.mxu0
  %221 = vmatprep.mubr.bf16.mxu0 0
  %222 = vmatmul.mubr.bf16.gmra.mxu0 %v151
  %v223 = vpop.f32.mrf.mxu0
  %v224 = vadd.f32 0.0, %v223
  %v225 = vpop.f32.mrf.mxu0
  %v226 = vpop.f32.mrf.mxu0
  %v227 = vadd.f32 0.0, %v226
  %v228 = vpop.f32.mrf.mxu0
  %229 = vmatprep.mubr.bf16.mxu0 0
  %230 = vmatmul.mubr.bf16.gmra.mxu0 %v154
  %v231 = vpop.f32.mrf.mxu0
  %v232 = vadd.f32 0.0, %v231
  %v233 = vpop.f32.mrf.mxu0
  %v234 = vpop.f32.mrf.mxu0
  %v235 = vadd.f32 0.0, %v234
  %v236 = vpop.f32.mrf.mxu0
  %237 = vmatprep.mubr.bf16.mxu0 0
  %238 = vmatmul.mubr.bf16.gmra.mxu0 %v157
  %v239 = vpop.f32.mrf.mxu0
  %v240 = vadd.f32 0.0, %v239
  %v241 = vpop.f32.mrf.mxu0
  %v242 = vpop.f32.mrf.mxu0
  %v243 = vadd.f32 0.0, %v242
  %v244 = vpop.f32.mrf.mxu0
  %245 = vmatprep.mubr.bf16.mxu0 0
  %246 = vmatmul.mubr.bf16.gmra.mxu0 %v160
  %v247 = vpop.f32.mrf.mxu0
  %v248 = vadd.f32 0.0, %v247
  %v249 = vpop.f32.mrf.mxu0
  %v250 = vpop.f32.mrf.mxu0
  %v251 = vadd.f32 0.0, %v250
  %v252 = vpop.f32.mrf.mxu0
  %253 = vmatprep.mubr.bf16.mxu0 0
  %254 = vmatmul.mubr.bf16.gmra.mxu0 %v163
  %v255 = vpop.f32.mrf.mxu0
  %v256 = vadd.f32 0.0, %v255
  %v257 = vpop.f32.mrf.mxu0
  %v258 = vpop.f32.mrf.mxu0
  %v259 = vadd.f32 0.0, %v258
  %v260 = vpop.f32.mrf.mxu0
  %261 = vdwg.mxu0
  %v262 = vadd.f32 %v36, %v200
  %v263 = vadd.f32 %v37, %v203
  %v264 = vadd.f32 %v38, %v208
  %v265 = vadd.f32 %v39, %v211
  %v266 = vadd.f32 %v40, %v216
  %v267 = vadd.f32 %v41, %v219
  %v268 = vadd.f32 %v42, %v224
  %v269 = vadd.f32 %v43, %v227
  %v270 = vadd.f32 %v44, %v232
  %v271 = vadd.f32 %v45, %v235
  %v272 = vadd.f32 %v46, %v240
  %v273 = vadd.f32 %v47, %v243
  %v274 = vadd.f32 %v48, %v248
  %v275 = vadd.f32 %v49, %v251
  %v276 = vadd.f32 %v50, %v256
  %v277 = vadd.f32 %v51, %v259
  %vm278 = vcmask 64512
  %279 = vst.msk [vmem:[#allocation2] sm:$0xff] %vm278, %v262
  %280 = vst.msk [vmem:[#allocation2 + $0x8] sm:$0xff] %vm278, %v263
  %281 = vst.msk [vmem:[#allocation2 + $0x10] sm:$0xff] %vm278, %v264
  %282 = vst.msk [vmem:[#allocation2 + $0x18] sm:$0xff] %vm278, %v265
  %283 = vst.msk [vmem:[#allocation2 + $0x20] sm:$0xff] %vm278, %v266
  %284 = vst.msk [vmem:[#allocation2 + $0x28] sm:$0xff] %vm278, %v267
  %285 = vst.msk [vmem:[#allocation2 + $0x30] sm:$0xff] %vm278, %v268
  %286 = vst.msk [vmem:[#allocation2 + $0x38] sm:$0xff] %vm278, %v269
  %287 = vst.msk [vmem:[#allocation2 + $0x40] sm:$0xff] %vm278, %v270
  %288 = vst.msk [vmem:[#allocation2 + $0x48] sm:$0xff] %vm278, %v271
  %289 = vst.msk [vmem:[#allocation2 + $0x50] sm:$0xff] %vm278, %v272
  %290 = vst.msk [vmem:[#allocation2 + $0x58] sm:$0xff] %vm278, %v273
  %291 = vst.msk [vmem:[#allocation2 + $0x60] sm:$0xff] %vm278, %v274
  %292 = vst.msk [vmem:[#allocation2 + $0x68] sm:$0xff] %vm278, %v275
  %293 = vst.msk [vmem:[#allocation2 + $0x70] sm:$0xff] %vm278, %v276
  %294 = vst.msk [vmem:[#allocation2 + $0x78] sm:$0xff] %vm278, %v277
  // Predicated region
  $region18: #{_lambda_.5} parent=0 // pred_check
    %p295 = pneg %p15
  $region19: #{_lambda_.5} parent=0 // pred_check_branch
    %297 = sbr.rel (%p295) target = $region21
  $region20: #{_lambda_.5} parent=0 // pred_region
    %v298 = vld [vmem:[#allocation2] sm:$0xff]
    %v299 = vld [vmem:[#allocation2 + $0x8] sm:$0xff]
    %v300 = vld [vmem:[#allocation2 + $0x10] sm:$0xff]
    %v301 = vld [vmem:[#allocation2 + $0x18] sm:$0xff]
    %v302 = vld [vmem:[#allocation2 + $0x20] sm:$0xff]
    %v303 = vld [vmem:[#allocation2 + $0x28] sm:$0xff]
    %v304 = vld [vmem:[#allocation2 + $0x30] sm:$0xff]
    %v305 = vld [vmem:[#allocation2 + $0x38] sm:$0xff]
    %v306 = vld [vmem:[#allocation2 + $0x40] sm:$0xff]
    %v307 = vld [vmem:[#allocation2 + $0x48] sm:$0xff]
    %v308 = vld [vmem:[#allocation2 + $0x50] sm:$0xff]
    %v309 = vld [vmem:[#allocation2 + $0x58] sm:$0xff]
    %v310 = vld [vmem:[#allocation2 + $0x60] sm:$0xff]
    %v311 = vld [vmem:[#allocation2 + $0x68] sm:$0xff]
    %v312 = vld [vmem:[#allocation2 + $0x70] sm:$0xff]
    %v313 = vld [vmem:[#allocation2 + $0x78] sm:$0xff]
    %v314 = vld [vmem:[%s2] sm:$0x1]
    %v316 = vlaneseq
    %v317 = vshrl.u32 %v316, 7
    %v318 = vsub.s32 0, %v317
    %v319 = vrot.slane %v314, %v318
    %v321 = vadd.f32 %v298, %v319
    %v322 = vadd.f32 %v299, %v319
    %v323 = vadd.f32 %v300, %v319
    %v324 = vadd.f32 %v301, %v319
    %v325 = vadd.f32 %v302, %v319
    %v326 = vadd.f32 %v303, %v319
    %v327 = vadd.f32 %v304, %v319
    %v328 = vadd.f32 %v305, %v319
    %v329 = vadd.f32 %v306, %v319
    %v330 = vadd.f32 %v307, %v319
    %v331 = vadd.f32 %v308, %v319
    %v332 = vadd.f32 %v309, %v319
    %v333 = vadd.f32 %v310, %v319
    %v334 = vadd.f32 %v311, %v319
    %v335 = vadd.f32 %v312, %v319
    %v336 = vadd.f32 %v313, %v319
    %v337 = vmul.f32 %v321, 0.2
    %v338 = vmul.f32 %v322, 0.2
    %v339 = vmul.f32 %v323, 0.2
    %v340 = vmul.f32 %v324, 0.2
    %v341 = vmul.f32 %v325, 0.2
    %v342 = vmul.f32 %v326, 0.2
    %v343 = vmul.f32 %v327, 0.2
    %v344 = vmul.f32 %v328, 0.2
    %v345 = vmul.f32 %v329, 0.2
    %v346 = vmul.f32 %v330, 0.2
    %v347 = vmul.f32 %v331, 0.2
    %v348 = vmul.f32 %v332, 0.2
    %v349 = vmul.f32 %v333, 0.2
    %v350 = vmul.f32 %v334, 0.2
    %v351 = vmul.f32 %v335, 0.2
    %v352 = vmul.f32 %v336, 0.2
    %v353 = vmax.f32 %v321, %v337
    %v354 = vmax.f32 %v322, %v338
    %v355 = vmax.f32 %v323, %v339
    %v356 = vmax.f32 %v324, %v340
    %v357 = vmax.f32 %v325, %v341
    %v358 = vmax.f32 %v326, %v342
    %v359 = vmax.f32 %v327, %v343
    %v360 = vmax.f32 %v328, %v344
    %v361 = vmax.f32 %v329, %v345
    %v362 = vmax.f32 %v330, %v346
    %v363 = vmax.f32 %v331, %v347
    %v364 = vmax.f32 %v332, %v348
    %v365 = vmax.f32 %v333, %v349
    %v366 = vmax.f32 %v334, %v350
    %v367 = vmax.f32 %v335, %v351
    %v368 = vmax.f32 %v336, %v352
    %v369 = vpack.c.bf16 %v354, %v353
    %v370 = vpack.c.bf16 %v356, %v355
    %v371 = vpack.c.bf16 %v358, %v357
    %v372 = vpack.c.bf16 %v360, %v359
    %v373 = vpack.c.bf16 %v362, %v361
    %v374 = vpack.c.bf16 %v364, %v363
    %v375 = vpack.c.bf16 %v366, %v365
    %v376 = vpack.c.bf16 %v368, %v367
    %v385 = vunpack.c.l.b16 %v369
    %v386 = vunpack.c.h.b16 %v369
    %v387 = vunpack.c.l.b16 %v370
    %v388 = vunpack.c.h.b16 %v370
    %v389 = vunpack.c.l.b16 %v371
    %v390 = vunpack.c.h.b16 %v371
    %v391 = vunpack.c.l.b16 %v372
    %v392 = vunpack.c.h.b16 %v372
    %v393 = vunpack.c.l.b16 %v373
    %v394 = vunpack.c.h.b16 %v373
    %v395 = vunpack.c.l.b16 %v374
    %v396 = vunpack.c.h.b16 %v374
    %v397 = vunpack.c.l.b16 %v375
    %v398 = vunpack.c.h.b16 %v375
    %v399 = vunpack.c.l.b16 %v376
    %v400 = vunpack.c.h.b16 %v376
    %v401 = vpack.c.b16 %v385, %v385
    %v402 = vpack.c.b16 %v386, %v386
    %v403 = vpack.c.b16 %v387, %v387
    %v404 = vpack.c.b16 %v388, %v388
    %v405 = vpack.c.b16 %v389, %v389
    %v406 = vpack.c.b16 %v390, %v390
    %v407 = vpack.c.b16 %v391, %v391
    %v408 = vpack.c.b16 %v392, %v392
    %v409 = vpack.c.b16 %v393, %v393
    %v410 = vpack.c.b16 %v394, %v394
    %v411 = vpack.c.b16 %v395, %v395
    %v412 = vpack.c.b16 %v396, %v396
    %v413 = vpack.c.b16 %v397, %v397
    %v414 = vpack.c.b16 %v398, %v398
    %v415 = vpack.c.b16 %v399, %v399
    %v416 = vpack.c.b16 %v400, %v400
    %vm433 = vcmask 60416
    %434 = vst.msk [vmem:[%s3] sm:$0xf] %vm433, %v401
    %435 = vst.msk [vmem:[%s3 + $0x4] sm:$0xf] %vm433, %v402
    %436 = vst.msk [vmem:[%s3 + $0x8] sm:$0xf] %vm433, %v403
    %437 = vst.msk [vmem:[%s3 + $0xc] sm:$0xf] %vm433, %v404
    %438 = vst.msk [vmem:[%s3 + $0x10] sm:$0xf] %vm433, %v405
    %439 = vst.msk [vmem:[%s3 + $0x14] sm:$0xf] %vm433, %v406
    %440 = vst.msk [vmem:[%s3 + $0x18] sm:$0xf] %vm433, %v407
    %441 = vst.msk [vmem:[%s3 + $0x1c] sm:$0xf] %vm433, %v408
    %442 = vst.msk [vmem:[%s3 + $0x20] sm:$0xf] %vm433, %v409
    %443 = vst.msk [vmem:[%s3 + $0x24] sm:$0xf] %vm433, %v410
    %444 = vst.msk [vmem:[%s3 + $0x28] sm:$0xf] %vm433, %v411
    %445 = vst.msk [vmem:[%s3 + $0x2c] sm:$0xf] %vm433, %v412
    %446 = vst.msk [vmem:[%s3 + $0x30] sm:$0xf] %vm433, %v413
    %447 = vst.msk [vmem:[%s3 + $0x34] sm:$0xf] %vm433, %v414
    %448 = vst.msk [vmem:[%s3 + $0x38] sm:$0xf] %vm433, %v415
    %449 = vst.msk [vmem:[%s3 + $0x3c] sm:$0xf] %vm433, %v416
  $region21: #{_lambda_.5} parent=0 // pred_fallthru
    _
  // Predicated region
  $region22: #{_lambda_.5} parent=0 // pred_check
    _
  $region23: #{_lambda_.5} parent=0 // pred_check_branch
    %451 = sbr.rel (0) target = $region25
  $region24: #{_lambda_.5} parent=0 // pred_region
    _
  $region25: #{_lambda_.5} parent=0 // pred_fallthru
    _
  // Predicated region
  $region26: #{_lambda_.5} parent=0 // pred_check
    _
  $region27: #{_lambda_.5} parent=0 // pred_check_branch
    %453 = sbr.rel (0) target = $region29
  $region28: #{_lambda_.5} parent=0 // pred_region
    _
  $region29: #{_lambda_.5} parent=0 // pred_fallthru
    _

// kernel: _lambda_.7
$region0: #{_lambda_.7}
  #allocation0 [shape = 'u32[]', space=smem, size = 0x4, offset = 0x4, fixed_abs, tag = 'smem constant byte address 0x4 - core index']
  #allocation1 [shape = 'u32[144,128]{1,0:T(1,128)}', space=vmem, size = 0x12000, scoped, tag = 'internal scratch']
  %s0 = inlined_call_operand.vmem [shape: bf16[32,16], index: 0, kind: input, shape index: {}]
  %s1 = inlined_call_operand.vmem [shape: f32[1,16], index: 1, kind: input, shape index: {}]
  %s2 = inlined_call_operand.vmem [shape: f32[1,16], index: 2, kind: input, shape index: {}]
  %s3 = inlined_call_operand.vmem [shape: bf16[32,16], index: 3, kind: output, shape index: {}]
  %s4 = sld [smem:[#allocation0]]
  $region22: #{_lambda_.7} parent=0
    _
  %s6 = ssub.s32 1, %s4
  %s7 = scalar_select 0, %s6, %s4
  // Predicated region
  $region2: #{_lambda_.7} parent=0 // pred_check
    _
  $region3: #{_lambda_.7} parent=0 // pred_check_branch
    %9 = sbr.rel (0) target = $region5
  $region4: #{_lambda_.7} parent=0 // pred_region
    _
  $region5: #{_lambda_.7} parent=0 // pred_fallthru
    _
  // Predicated region
  $region6: #{_lambda_.7} parent=0 // pred_check
    _
  $region7: #{_lambda_.7} parent=0 // pred_check_branch
    %11 = sbr.rel (0) target = $region9
  $region8: #{_lambda_.7} parent=0 // pred_region
    _
  $region9: #{_lambda_.7} parent=0 // pred_fallthru
    _
  // Predicated region
  $region10: #{_lambda_.7} parent=0 // pred_check
    _
  $region11: #{_lambda_.7} parent=0 // pred_check_branch
    %13 = sbr.rel (0) target = $region13
  $region12: #{_lambda_.7} parent=0 // pred_region
    _
  $region13: #{_lambda_.7} parent=0 // pred_fallthru
    _
  %v14 = vld [vmem:[%s0] sm:$0xf]
  %v15 = vld [vmem:[%s0 + $0x4] sm:$0xf]
  %v16 = vld [vmem:[%s0 + $0x8] sm:$0xf]
  %v17 = vld [vmem:[%s0 + $0xc] sm:$0xf]
  %v18 = vunpack.c.l.bf16 %v14
  %v19 = vunpack.c.l.bf16 %v15
  %v20 = vunpack.c.l.bf16 %v16
  %v21 = vunpack.c.l.bf16 %v17
  %v22 = vld [vmem:[%s1] sm:$0x1]
  %v24 = vlaneseq
  %v25 = vshrl.u32 %v24, 7
  %v26 = vsub.s32 0, %v25
  %v27 = vrot.slane %v22, %v26
  %v29 = vmul.f32 %v18, %v27
  %v30 = vmul.f32 %v19, %v27
  %v31 = vmul.f32 %v20, %v27
  %v32 = vmul.f32 %v21, %v27
  %v33 = vld [vmem:[%s2] sm:$0x1]
  %v35 = vlaneseq
  %v36 = vshrl.u32 %v35, 7
  %v37 = vsub.s32 0, %v36
  %v38 = vrot.slane %v33, %v37
  %v40 = vadd.f32 %v29, %v38
  %v41 = vadd.f32 %v30, %v38
  %v42 = vadd.f32 %v31, %v38
  %v43 = vadd.f32 %v32, %v38
  %v44 = vmul.f32 %v40, 0.2
  %v45 = vmul.f32 %v41, 0.2
  %v46 = vmul.f32 %v42, 0.2
  %v47 = vmul.f32 %v43, 0.2
  %v48 = vmax.f32 %v40, %v44
  %v49 = vmax.f32 %v41, %v45
  %v50 = vmax.f32 %v42, %v46
  %v51 = vmax.f32 %v43, %v47
  %v52 = vpack.c.bf16 %v49, %v48
  %v53 = vpack.c.bf16 %v51, %v50
  %v56 = vunpack.c.l.b16 %v52
  %v57 = vunpack.c.h.b16 %v52
  %v58 = vunpack.c.l.b16 %v53
  %v59 = vunpack.c.h.b16 %v53
  %v60 = vpack.c.b16 %v56, %v56
  %v61 = vpack.c.b16 %v57, %v57
  %v62 = vpack.c.b16 %v58, %v58
  %v63 = vpack.c.b16 %v59, %v59
  %vm68 = vcmask 125952
  %69 = vst.msk [vmem:[%s3] sm:$0xf] %vm68, %v60
  %70 = vst.msk [vmem:[%s3 + $0x4] sm:$0xf] %vm68, %v61
  %71 = vst.msk [vmem:[%s3 + $0x8] sm:$0xf] %vm68, %v62
  %72 = vst.msk [vmem:[%s3 + $0xc] sm:$0xf] %vm68, %v63
  // Predicated region
  $region14: #{_lambda_.7} parent=0 // pred_check
    _
  $region15: #{_lambda_.7} parent=0 // pred_check_branch
    %74 = sbr.rel (0) target = $region17
  $region16: #{_lambda_.7} parent=0 // pred_region
    _
  $region17: #{_lambda_.7} parent=0 // pred_fallthru
    _
  // Predicated region
  $region18: #{_lambda_.7} parent=0 // pred_check
    _
  $region19: #{_lambda_.7} parent=0 // pred_check_branch
    %76 = sbr.rel (0) target = $region21
  $region20: #{_lambda_.7} parent=0 // pred_region
    _
  $region21: #{_lambda_.7} parent=0 // pred_fallthru
    _

// kernel: _lambda_.6
$region0: #{_lambda_.6}
  #allocation0 [shape = 'u32[]', space=smem, size = 0x4, offset = 0x4, fixed_abs, tag = 'smem constant byte address 0x4 - core index']
  #allocation1 [shape = 'u32[144,128]{1,0:T(1,128)}', space=vmem, size = 0x12000, scoped, tag = 'internal scratch']
  #allocation2 [shape = 'f32[32,16]{1,0:T(8,128)}', space=vmem, size = 0x4000, scoped, tag = 'scratch operand']
  %s0 = inlined_call_operand.vmem [shape: bf16[32,128], index: 0, kind: input, shape index: {}]
  %s1 = inlined_call_operand.vmem [shape: bf16[128,16], index: 1, kind: input, shape index: {}]
  %s2 = inlined_call_operand.vmem [shape: bf16[32,16], index: 2, kind: output, shape index: {0}]
  %s3 = inlined_call_operand.vmem [shape: f32[1,2,16], index: 3, kind: output, shape index: {1}]
  %4 = xla_tuple %s2, %s3
  %s5 = sld [smem:[#allocation0]]
  $region34: #{_lambda_.6} parent=0
    _
  %s7 = ssub.s32 1, %s5
  %s8 = scalar_select 0, %s7, %s5
  // Predicated region
  $region2: #{_lambda_.6} parent=0 // pred_check
    _
  $region3: #{_lambda_.6} parent=0 // pred_check_branch
    %10 = sbr.rel (0) target = $region5
  $region4: #{_lambda_.6} parent=0 // pred_region
    _
  $region5: #{_lambda_.6} parent=0 // pred_fallthru
    _
  // Predicated region
  $region6: #{_lambda_.6} parent=0 // pred_check
    _
  $region7: #{_lambda_.6} parent=0 // pred_check_branch
    %12 = sbr.rel (0) target = $region9
  $region8: #{_lambda_.6} parent=0 // pred_region
    _
  $region9: #{_lambda_.6} parent=0 // pred_fallthru
    _
  %p14 = scmp.eq.s32.totalorder 0, 0
  // Predicated region
  $region10: #{_lambda_.6} parent=0 // pred_check
    %p15 = pneg %p14
  $region11: #{_lambda_.6} parent=0 // pred_check_branch
    %17 = sbr.rel (%p15) target = $region13
  $region12: #{_lambda_.6} parent=0 // pred_region
    %vm18 = vcmask 130048
    %19 = vst.msk [vmem:[#allocation2] sm:$0xff] %vm18, 0.0
    %20 = vst.msk [vmem:[#allocation2 + $0x8] sm:$0xff] %vm18, 0.0
    %21 = vst.msk [vmem:[#allocation2 + $0x10] sm:$0xff] %vm18, 0.0
    %22 = vst.msk [vmem:[#allocation2 + $0x18] sm:$0xff] %vm18, 0.0
  $region13: #{_lambda_.6} parent=0 // pred_fallthru
    _
  %v23 = vld [vmem:[#allocation2] sm:$0xff]
  %v24 = vld [vmem:[#allocation2 + $0x8] sm:$0xff]
  %v25 = vld [vmem:[#allocation2 + $0x10] sm:$0xff]
  %v26 = vld [vmem:[#allocation2 + $0x18] sm:$0xff]
  %v27 = vld [vmem:[%s0] sm:$0xf]
  %v28 = vld [vmem:[%s0 + $0x4] sm:$0xf]
  %v29 = vld [vmem:[%s0 + $0x8] sm:$0xf]
  %v30 = vld [vmem:[%s0 + $0xc] sm:$0xf]
  %v31 = vld [vmem:[%s1] sm:$0xf]
  %v32 = vld [vmem:[%s1 + $0x4] sm:$0xf]
  %v33 = vld [vmem:[%s1 + $0x8] sm:$0xf]
  %v34 = vld [vmem:[%s1 + $0xc] sm:$0xf]
  %v35 = vld [vmem:[%s1 + $0x10] sm:$0xf]
  %v36 = vld [vmem:[%s1 + $0x14] sm:$0xf]
  %v37 = vld [vmem:[%s1 + $0x18] sm:$0xf]
  %v38 = vld [vmem:[%s1 + $0x1c] sm:$0xf]
  %v39 = vld [vmem:[%s1 + $0x20] sm:$0xf]
  %v40 = vld [vmem:[%s1 + $0x24] sm:$0xf]
  %v41 = vld [vmem:[%s1 + $0x28] sm:$0xf]
  %v42 = vld [vmem:[%s1 + $0x2c] sm:$0xf]
  %v43 = vld [vmem:[%s1 + $0x30] sm:$0xf]
  %v44 = vld [vmem:[%s1 + $0x34] sm:$0xf]
  %v45 = vld [vmem:[%s1 + $0x38] sm:$0xf]
  %v46 = vld [vmem:[%s1 + $0x3c] sm:$0xf]
  %v51 = vunpack.c.l.b16 %v27
  %v52 = vunpack.c.l.b16 %v28
  %v53 = vunpack.c.l.b16 %v29
  %v54 = vunpack.c.l.b16 %v30
  %v55 = vpack.c.b16 %v52, %v51
  %v56 = vpack.c.b16 %v54, %v53
  %v75 = vunpack.c.l.b16 %v31
  %v76 = vunpack.c.l.b16 %v32
  %v77 = vunpack.c.l.b16 %v33
  %v78 = vunpack.c.l.b16 %v34
  %v79 = vunpack.c.l.b16 %v35
  %v80 = vunpack.c.l.b16 %v36
  %v81 = vunpack.c.l.b16 %v37
  %v82 = vunpack.c.l.b16 %v38
  %v83 = vunpack.c.l.b16 %v39
  %v84 = vunpack.c.l.b16 %v40
  %v85 = vunpack.c.l.b16 %v41
  %v86 = vunpack.c.l.b16 %v42
  %v87 = vunpack.c.l.b16 %v43
  %v88 = vunpack.c.l.b16 %v44
  %v89 = vunpack.c.l.b16 %v45
  %v90 = vunpack.c.l.b16 %v46
  %v91 = vpack.c.b16 %v76, %v75
  %v92 = vpack.c.b16 %v78, %v77
  %v93 = vpack.c.b16 %v80, %v79
  %v94 = vpack.c.b16 %v82, %v81
  %v95 = vpack.c.b16 %v84, %v83
  %v96 = vpack.c.b16 %v86, %v85
  %v97 = vpack.c.b16 %v88, %v87
  %v98 = vpack.c.b16 %v90, %v89
  %107 = vmatprep.subr.bf16.mxu0 0
  %108 = vmatpush1.bf16.msra.mxu0 %v98
  %109 = vmatprep.subr.bf16.mxu0 0
  %110 = vmatpush1.bf16.msra.mxu0 %v97
  %111 = vmatprep.subr.bf16.mxu0 0
  %112 = vmatpush1.bf16.msra.mxu0 %v96
  %113 = vmatprep.subr.bf16.mxu0 0
  %114 = vmatpush1.bf16.msra.mxu0 %v95
  %115 = vmatprep.subr.bf16.mxu0 0
  %116 = vmatpush1.bf16.msra.mxu0 %v94
  %117 = vmatprep.subr.bf16.mxu0 0
  %118 = vmatpush1.bf16.msra.mxu0 %v93
  %119 = vmatprep.subr.bf16.mxu0 0
  %120 = vmatpush1.bf16.msra.mxu0 %v92
  %121 = vmatprep.subr.bf16.mxu0 0
  %122 = vmatpush1.bf16.msra.mxu0 %v91
  %123 = vmatprep.subr.bf16.mxu0 0
  %124 = vmatpush2.bf16.msra.mxu0 0
  %125 = vmatprep.subr.bf16.mxu0 0
  %126 = vmatpush2.bf16.msra.mxu0 0
  %127 = vmatprep.subr.bf16.mxu0 0
  %128 = vmatpush2.bf16.msra.mxu0 0
  %129 = vmatprep.subr.bf16.mxu0 0
  %130 = vmatpush2.bf16.msra.mxu0 0
  %131 = vmatprep.subr.bf16.mxu0 0
  %132 = vmatpush2.bf16.msra.mxu0 0
  %133 = vmatprep.subr.bf16.mxu0 0
  %134 = vmatpush2.bf16.msra.mxu0 0
  %135 = vmatprep.subr.bf16.mxu0 0
  %136 = vmatpush2.bf16.msra.mxu0 0
  %137 = vmatprep.subr.bf16.mxu0 0
  %138 = vmatpush2.bf16.msra.mxu0 0
  %139 = vmatprep.mubr.bf16.mxu0 0
  %140 = vmatmul.mubr.bf16.gmra.mxu0 %v55
  %v141 = vpop.f32.mrf.mxu0
  %v142 = vadd.f32 0.0, %v141
  %v143 = vpop.f32.mrf.mxu0
  %v144 = vpop.f32.mrf.mxu0
  %v145 = vadd.f32 0.0, %v144
  %v146 = vpop.f32.mrf.mxu0
  %147 = vmatprep.mubr.bf16.mxu0 0
  %148 = vmatmul.mubr.bf16.gmra.mxu0 %v56
  %v149 = vpop.f32.mrf.mxu0
  %v150 = vadd.f32 0.0, %v149
  %v151 = vpop.f32.mrf.mxu0
  %v152 = vpop.f32.mrf.mxu0
  %v153 = vadd.f32 0.0, %v152
  %v154 = vpop.f32.mrf.mxu0
  %155 = vdwg.mxu0
  %v156 = vadd.f32 %v23, %v142
  %v157 = vadd.f32 %v24, %v145
  %v158 = vadd.f32 %v25, %v150
  %v159 = vadd.f32 %v26, %v153
  %vm160 = vcmask 130048
  %161 = vst.msk [vmem:[#allocation2] sm:$0xff] %vm160, %v156
  %162 = vst.msk [vmem:[#allocation2 + $0x8] sm:$0xff] %vm160, %v157
  %163 = vst.msk [vmem:[#allocation2 + $0x10] sm:$0xff] %vm160, %v158
  %164 = vst.msk [vmem:[#allocation2 + $0x18] sm:$0xff] %vm160, %v159
  // Predicated region
  $region14: #{_lambda_.6} parent=0 // pred_check
    %p165 = pneg %p14
  $region15: #{_lambda_.6} parent=0 // pred_check_branch
    %167 = sbr.rel (%p165) target = $region17
  $region16: #{_lambda_.6} parent=0 // pred_region
    %v168 = vld [vmem:[#allocation2] sm:$0xff]
    %v169 = vld [vmem:[#allocation2 + $0x8] sm:$0xff]
    %v170 = vld [vmem:[#allocation2 + $0x10] sm:$0xff]
    %v171 = vld [vmem:[#allocation2 + $0x18] sm:$0xff]
    %v172 = vpack.c.bf16 %v169, %v168
    %v173 = vpack.c.bf16 %v171, %v170
    %v176 = vunpack.c.l.b16 %v172
    %v177 = vunpack.c.h.b16 %v172
    %v178 = vunpack.c.l.b16 %v173
    %v179 = vunpack.c.h.b16 %v173
    %v180 = vpack.c.b16 %v176, %v176
    %v181 = vpack.c.b16 %v177, %v177
    %v182 = vpack.c.b16 %v178, %v178
    %v183 = vpack.c.b16 %v179, %v179
    %vm188 = vcmask 125952
    %189 = vst.msk [vmem:[%s2] sm:$0xf] %vm188, %v180
    %190 = vst.msk [vmem:[%s2 + $0x4] sm:$0xf] %vm188, %v181
    %191 = vst.msk [vmem:[%s2 + $0x8] sm:$0xf] %vm188, %v182
    %192 = vst.msk [vmem:[%s2 + $0xc] sm:$0xf] %vm188, %v183
    %v193 = vsel %vm160, %v168, 0.0
    %v194 = vsel %vm160, %v169, 0.0
    %v195 = vadd.f32 %v193, %v194
    %v196 = vsel %vm160, %v170, 0.0
    %v197 = vadd.f32 %v195, %v196
    %v198 = vsel %vm160, %v171, 0.0
    %v199 = vadd.f32 %v197, %v198
    %v200 = vrot.slane %v199, 4
    %v201 = vadd.f32 %v199, %v200
    %v202 = vrot.slane %v201, 2
    %v203 = vadd.f32 %v201, %v202
    %v204 = vrot.slane %v203, 1
    %v205 = vadd.f32 %v203, %v204
    %v206 = vmul.f32 %v168, %v168
    %v207 = vmul.f32 %v169, %v169
    %v208 = vmul.f32 %v170, %v170
    %v209 = vmul.f32 %v171, %v171
    %v210 = vsel %vm160, %v206, 0.0
    %v211 = vsel %vm160, %v207, 0.0
    %v212 = vadd.f32 %v210, %v211
    %v213 = vsel %vm160, %v208, 0.0
    %v214 = vadd.f32 %v212, %v213
    %v215 = vsel %vm160, %v209, 0.0
    %v216 = vadd.f32 %v214, %v215
    %v217 = vrot.slane %v216, 4
    %v218 = vadd.f32 %v216, %v217
    %v219 = vrot.slane %v218, 2
    %v220 = vadd.f32 %v218, %v219
    %v221 = vrot.slane %v220, 1
    %v222 = vadd.f32 %v220, %v221
    %vm223 = vcmask 1040384
    %v224 = vsel %vm223, %v205, %v222
    %vm225 = vcmask 123904
    %226 = vst.msk [vmem:[%s3] sm:$0x3] %vm225, %v224
  $region17: #{_lambda_.6} parent=0 // pred_fallthru
    _
  // Predicated region
  $region18: #{_lambda_.6} parent=0 // pred_check
    _
  $region19: #{_lambda_.6} parent=0 // pred_check_branch
    %228 = sbr.rel (0) target = $region21
  $region20: #{_lambda_.6} parent=0 // pred_region
    _
  $region21: #{_lambda_.6} parent=0 // pred_fallthru
    _
  // Predicated region
  $region22: #{_lambda_.6} parent=0 // pred_check
    _
  $region23: #{_lambda_.6} parent=0 // pred_check_branch
    %230 = sbr.rel (0) target = $region25
  $region24: #{_lambda_.6} parent=0 // pred_region
    _
  $region25: #{_lambda_.6} parent=0 // pred_fallthru
    _
  // Predicated region
  $region26: #{_lambda_.6} parent=0 // pred_check
    _
  $region27: #{_lambda_.6} parent=0 // pred_check_branch
    %232 = sbr.rel (0) target = $region29
  $region28: #{_lambda_.6} parent=0 // pred_region
    _
  $region29: #{_lambda_.6} parent=0 // pred_fallthru
    _
  // Predicated region
  $region30: #{_lambda_.6} parent=0 // pred_check
    _
  $region31: #{_lambda_.6} parent=0 // pred_check_branch
    %234 = sbr.rel (0) target = $region33
  $region32: #{_lambda_.6} parent=0 // pred_region
    _
  $region33: #{_lambda_.6} parent=0 // pred_fallthru
    _

// kernel: _lambda_.9
$region0: #{_lambda_.9}
  #allocation0 [shape = 'u32[]', space=smem, size = 0x4, offset = 0x4, fixed_abs, tag = 'smem constant byte address 0x4 - core index']
  #allocation1 [shape = 'u32[144,128]{1,0:T(1,128)}', space=vmem, size = 0x12000, scoped, tag = 'internal scratch']
  %s0 = inlined_call_operand.vmem [shape: bf16[32,32], index: 0, kind: input, shape index: {}]
  %s1 = inlined_call_operand.vmem [shape: f32[1,32], index: 1, kind: input, shape index: {}]
  %s2 = inlined_call_operand.vmem [shape: f32[1,32], index: 2, kind: input, shape index: {}]
  %s3 = inlined_call_operand.vmem [shape: bf16[32,32], index: 3, kind: output, shape index: {}]
  %s4 = sld [smem:[#allocation0]]
  $region22: #{_lambda_.9} parent=0
    _
  %s6 = ssub.s32 1, %s4
  %s7 = scalar_select 0, %s6, %s4
  // Predicated region
  $region2: #{_lambda_.9} parent=0 // pred_check
    _
  $region3: #{_lambda_.9} parent=0 // pred_check_branch
    %9 = sbr.rel (0) target = $region5
  $region4: #{_lambda_.9} parent=0 // pred_region
    _
  $region5: #{_lambda_.9} parent=0 // pred_fallthru
    _
  // Predicated region
  $region6: #{_lambda_.9} parent=0 // pred_check
    _
  $region7: #{_lambda_.9} parent=0 // pred_check_branch
    %11 = sbr.rel (0) target = $region9
  $region8: #{_lambda_.9} parent=0 // pred_region
    _
  $region9: #{_lambda_.9} parent=0 // pred_fallthru
    _
  // Predicated region
  $region10: #{_lambda_.9} parent=0 // pred_check
    _
  $region11: #{_lambda_.9} parent=0 // pred_check_branch
    %13 = sbr.rel (0) target = $region13
  $region12: #{_lambda_.9} parent=0 // pred_region
    _
  $region13: #{_lambda_.9} parent=0 // pred_fallthru
    _
  %v14 = vld [vmem:[%s0] sm:$0xf]
  %v15 = vld [vmem:[%s0 + $0x4] sm:$0xf]
  %v16 = vld [vmem:[%s0 + $0x8] sm:$0xf]
  %v17 = vld [vmem:[%s0 + $0xc] sm:$0xf]
  %v18 = vunpack.c.l.bf16 %v14
  %v19 = vunpack.c.l.bf16 %v15
  %v20 = vunpack.c.l.bf16 %v16
  %v21 = vunpack.c.l.bf16 %v17
  %v22 = vld [vmem:[%s1] sm:$0x1]
  %v24 = vlaneseq
  %v25 = vshrl.u32 %v24, 7
  %v26 = vsub.s32 0, %v25
  %v27 = vrot.slane %v22, %v26
  %v29 = vmul.f32 %v18, %v27
  %v30 = vmul.f32 %v19, %v27
  %v31 = vmul.f32 %v20, %v27
  %v32 = vmul.f32 %v21, %v27
  %v33 = vld [vmem:[%s2] sm:$0x1]
  %v35 = vlaneseq
  %v36 = vshrl.u32 %v35, 7
  %v37 = vsub.s32 0, %v36
  %v38 = vrot.slane %v33, %v37
  %v40 = vadd.f32 %v29, %v38
  %v41 = vadd.f32 %v30, %v38
  %v42 = vadd.f32 %v31, %v38
  %v43 = vadd.f32 %v32, %v38
  %v44 = vmul.f32 %v40, 0.2
  %v45 = vmul.f32 %v41, 0.2
  %v46 = vmul.f32 %v42, 0.2
  %v47 = vmul.f32 %v43, 0.2
  %v48 = vmax.f32 %v40, %v44
  %v49 = vmax.f32 %v41, %v45
  %v50 = vmax.f32 %v42, %v46
  %v51 = vmax.f32 %v43, %v47
  %v52 = vpack.c.bf16 %v49, %v48
  %v53 = vpack.c.bf16 %v51, %v50
  %v56 = vunpack.c.l.b16 %v52
  %v57 = vunpack.c.h.b16 %v52
  %v58 = vunpack.c.l.b16 %v53
  %v59 = vunpack.c.h.b16 %v53
  %v60 = vpack.c.b16 %v56, %v56
  %v61 = vpack.c.b16 %v57, %v57
  %v62 = vpack.c.b16 %v58, %v58
  %v63 = vpack.c.b16 %v59, %v59
  %vm68 = vcmask 257024
  %69 = vst.msk [vmem:[%s3] sm:$0xf] %vm68, %v60
  %70 = vst.msk [vmem:[%s3 + $0x4] sm:$0xf] %vm68, %v61
  %71 = vst.msk [vmem:[%s3 + $0x8] sm:$0xf] %vm68, %v62
  %72 = vst.msk [vmem:[%s3 + $0xc] sm:$0xf] %vm68, %v63
  // Predicated region
  $region14: #{_lambda_.9} parent=0 // pred_check
    _
  $region15: #{_lambda_.9} parent=0 // pred_check_branch
    %74 = sbr.rel (0) target = $region17
  $region16: #{_lambda_.9} parent=0 // pred_region
    _
  $region17: #{_lambda_.9} parent=0 // pred_fallthru
    _
  // Predicated region
  $region18: #{_lambda_.9} parent=0 // pred_check
    _
  $region19: #{_lambda_.9} parent=0 // pred_check_branch
    %76 = sbr.rel (0) target = $region21
  $region20: #{_lambda_.9} parent=0 // pred_region
    _
  $region21: #{_lambda_.9} parent=0 // pred_fallthru
    _

// kernel: _lambda_.8
$region0: #{_lambda_.8}
  #allocation0 [shape = 'u32[]', space=smem, size = 0x4, offset = 0x4, fixed_abs, tag = 'smem constant byte address 0x4 - core index']
  #allocation1 [shape = 'u32[144,128]{1,0:T(1,128)}', space=vmem, size = 0x12000, scoped, tag = 'internal scratch']
  #allocation2 [shape = 'f32[32,32]{1,0:T(8,128)}', space=vmem, size = 0x4000, scoped, tag = 'scratch operand']
  %s0 = inlined_call_operand.vmem [shape: bf16[32,256], index: 0, kind: input, shape index: {}]
  %s1 = inlined_call_operand.vmem [shape: bf16[256,32], index: 1, kind: input, shape index: {}]
  %s2 = inlined_call_operand.vmem [shape: bf16[32,32], index: 2, kind: output, shape index: {0}]
  %s3 = inlined_call_operand.vmem [shape: f32[1,2,32], index: 3, kind: output, shape index: {1}]
  %4 = xla_tuple %s2, %s3
  %s5 = sld [smem:[#allocation0]]
  $region34: #{_lambda_.8} parent=0
    _
  %s7 = ssub.s32 1, %s5
  %s8 = scalar_select 0, %s7, %s5
  // Predicated region
  $region2: #{_lambda_.8} parent=0 // pred_check
    _
  $region3: #{_lambda_.8} parent=0 // pred_check_branch
    %10 = sbr.rel (0) target = $region5
  $region4: #{_lambda_.8} parent=0 // pred_region
    _
  $region5: #{_lambda_.8} parent=0 // pred_fallthru
    _
  // Predicated region
  $region6: #{_lambda_.8} parent=0 // pred_check
    _
  $region7: #{_lambda_.8} parent=0 // pred_check_branch
    %12 = sbr.rel (0) target = $region9
  $region8: #{_lambda_.8} parent=0 // pred_region
    _
  $region9: #{_lambda_.8} parent=0 // pred_fallthru
    _
  %p14 = scmp.eq.s32.totalorder 0, 0
  // Predicated region
  $region10: #{_lambda_.8} parent=0 // pred_check
    %p15 = pneg %p14
  $region11: #{_lambda_.8} parent=0 // pred_check_branch
    %17 = sbr.rel (%p15) target = $region13
  $region12: #{_lambda_.8} parent=0 // pred_region
    %vm18 = vcmask 261120
    %19 = vst.msk [vmem:[#allocation2] sm:$0xff] %vm18, 0.0
    %20 = vst.msk [vmem:[#allocation2 + $0x8] sm:$0xff] %vm18, 0.0
    %21 = vst.msk [vmem:[#allocation2 + $0x10] sm:$0xff] %vm18, 0.0
    %22 = vst.msk [vmem:[#allocation2 + $0x18] sm:$0xff] %vm18, 0.0
  $region13: #{_lambda_.8} parent=0 // pred_fallthru
    _
  %v23 = vld [vmem:[#allocation2] sm:$0xff]
  %v24 = vld [vmem:[#allocation2 + $0x8] sm:$0xff]
  %v25 = vld [vmem:[#allocation2 + $0x10] sm:$0xff]
  %v26 = vld [vmem:[#allocation2 + $0x18] sm:$0xff]
  %v27 = vld [vmem:[%s0] sm:$0xff]
  %v28 = vld [vmem:[%s0 + $0x8] sm:$0xff]
  %v29 = vld [vmem:[%s0 + $0x10] sm:$0xff]
  %v30 = vld [vmem:[%s0 + $0x18] sm:$0xff]
  %v31 = vld [vmem:[%s1] sm:$0xf]
  %v32 = vld [vmem:[%s1 + $0x4] sm:$0xf]
  %v33 = vld [vmem:[%s1 + $0x8] sm:$0xf]
  %v34 = vld [vmem:[%s1 + $0xc] sm:$0xf]
  %v35 = vld [vmem:[%s1 + $0x10] sm:$0xf]
  %v36 = vld [vmem:[%s1 + $0x14] sm:$0xf]
  %v37 = vld [vmem:[%s1 + $0x18] sm:$0xf]
  %v38 = vld [vmem:[%s1 + $0x1c] sm:$0xf]
  %v39 = vld [vmem:[%s1 + $0x20] sm:$0xf]
  %v40 = vld [vmem:[%s1 + $0x24] sm:$0xf]
  %v41 = vld [vmem:[%s1 + $0x28] sm:$0xf]
  %v42 = vld [vmem:[%s1 + $0x2c] sm:$0xf]
  %v43 = vld [vmem:[%s1 + $0x30] sm:$0xf]
  %v44 = vld [vmem:[%s1 + $0x34] sm:$0xf]
  %v45 = vld [vmem:[%s1 + $0x38] sm:$0xf]
  %v46 = vld [vmem:[%s1 + $0x3c] sm:$0xf]
  %v47 = vld [vmem:[%s1 + $0x40] sm:$0xf]
  %v48 = vld [vmem:[%s1 + $0x44] sm:$0xf]
  %v49 = vld [vmem:[%s1 + $0x48] sm:$0xf]
  %v50 = vld [vmem:[%s1 + $0x4c] sm:$0xf]
  %v51 = vld [vmem:[%s1 + $0x50] sm:$0xf]
  %v52 = vld [vmem:[%s1 + $0x54] sm:$0xf]
  %v53 = vld [vmem:[%s1 + $0x58] sm:$0xf]
  %v54 = vld [vmem:[%s1 + $0x5c] sm:$0xf]
  %v55 = vld [vmem:[%s1 + $0x60] sm:$0xf]
  %v56 = vld [vmem:[%s1 + $0x64] sm:$0xf]
  %v57 = vld [vmem:[%s1 + $0x68] sm:$0xf]
  %v58 = vld [vmem:[%s1 + $0x6c] sm:$0xf]
  %v59 = vld [vmem:[%s1 + $0x70] sm:$0xf]
  %v60 = vld [vmem:[%s1 + $0x74] sm:$0xf]
  %v61 = vld [vmem:[%s1 + $0x78] sm:$0xf]
  %v62 = vld [vmem:[%s1 + $0x7c] sm:$0xf]
  %v67 = vunpack.c.l.b16 %v27
  %v68 = vunpack.c.h.b16 %v27
  %v69 = vunpack.c.l.b16 %v28
  %v70 = vunpack.c.h.b16 %v28
  %v71 = vunpack.c.l.b16 %v29
  %v72 = vunpack.c.h.b16 %v29
  %v73 = vunpack.c.l.b16 %v30
  %v74 = vunpack.c.h.b16 %v30
  %v75 = vpack.c.b16 %v69, %v67
  %v76 = vpack.c.b16 %v70, %v68
  %v77 = vpack.c.b16 %v73, %v71
  %v78 = vpack.c.b16 %v74, %v72
  %v115 = vunpack.c.l.b16 %v31
  %v116 = vunpack.c.l.b16 %v32
  %v117 = vunpack.c.l.b16 %v33
  %v118 = vunpack.c.l.b16 %v34
  %v119 = vunpack.c.l.b16 %v35
  %v120 = vunpack.c.l.b16 %v36
  %v121 = vunpack.c.l.b16 %v37
  %v122 = vunpack.c.l.b16 %v38
  %v123 = vunpack.c.l.b16 %v39
  %v124 = vunpack.c.l.b16 %v40
  %v125 = vunpack.c.l.b16 %v41
  %v126 = vunpack.c.l.b16 %v42
  %v127 = vunpack.c.l.b16 %v43
  %v128 = vunpack.c.l.b16 %v44
  %v129 = vunpack.c.l.b16 %v45
  %v130 = vunpack.c.l.b16 %v46
  %v131 = vunpack.c.l.b16 %v47
  %v132 = vunpack.c.l.b16 %v48
  %v133 = vunpack.c.l.b16 %v49
  %v134 = vunpack.c.l.b16 %v50
  %v135 = vunpack.c.l.b16 %v51
  %v136 = vunpack.c.l.b16 %v52
  %v137 = vunpack.c.l.b16 %v53
  %v138 = vunpack.c.l.b16 %v54
  %v139 = vunpack.c.l.b16 %v55
  %v140 = vunpack.c.l.b16 %v56
  %v141 = vunpack.c.l.b16 %v57
  %v142 = vunpack.c.l.b16 %v58
  %v143 = vunpack.c.l.b16 %v59
  %v144 = vunpack.c.l.b16 %v60
  %v145 = vunpack.c.l.b16 %v61
  %v146 = vunpack.c.l.b16 %v62
  %v147 = vpack.c.b16 %v116, %v115
  %v148 = vpack.c.b16 %v118, %v117
  %v149 = vpack.c.b16 %v120, %v119
  %v150 = vpack.c.b16 %v122, %v121
  %v151 = vpack.c.b16 %v124, %v123
  %v152 = vpack.c.b16 %v126, %v125
  %v153 = vpack.c.b16 %v128, %v127
  %v154 = vpack.c.b16 %v130, %v129
  %v155 = vpack.c.b16 %v132, %v131
  %v156 = vpack.c.b16 %v134, %v133
  %v157 = vpack.c.b16 %v136, %v135
  %v158 = vpack.c.b16 %v138, %v137
  %v159 = vpack.c.b16 %v140, %v139
  %v160 = vpack.c.b16 %v142, %v141
  %v161 = vpack.c.b16 %v144, %v143
  %v162 = vpack.c.b16 %v146, %v145
  %179 = vmatprep.subr.bf16.mxu0 0
  %180 = vmatpush1.bf16.msra.mxu0 %v154
  %181 = vmatprep.subr.bf16.mxu0 0
  %182 = vmatpush1.bf16.msra.mxu0 %v153
  %183 = vmatprep.subr.bf16.mxu0 0
  %184 = vmatpush1.bf16.msra.mxu0 %v152
  %185 = vmatprep.subr.bf16.mxu0 0
  %186 = vmatpush1.bf16.msra.mxu0 %v151
  %187 = vmatprep.subr.bf16.mxu0 0
  %188 = vmatpush1.bf16.msra.mxu0 %v150
  %189 = vmatprep.subr.bf16.mxu0 0
  %190 = vmatpush1.bf16.msra.mxu0 %v149
  %191 = vmatprep.subr.bf16.mxu0 0
  %192 = vmatpush1.bf16.msra.mxu0 %v148
  %193 = vmatprep.subr.bf16.mxu0 0
  %194 = vmatpush1.bf16.msra.mxu0 %v147
  %195 = vmatprep.subr.bf16.mxu0 0
  %196 = vmatpush2.bf16.msra.mxu0 %v162
  %197 = vmatprep.subr.bf16.mxu0 0
  %198 = vmatpush2.bf16.msra.mxu0 %v161
  %199 = vmatprep.subr.bf16.mxu0 0
  %200 = vmatpush2.bf16.msra.mxu0 %v160
  %201 = vmatprep.subr.bf16.mxu0 0
  %202 = vmatpush2.bf16.msra.mxu0 %v159
  %203 = vmatprep.subr.bf16.mxu0 0
  %204 = vmatpush2.bf16.msra.mxu0 %v158
  %205 = vmatprep.subr.bf16.mxu0 0
  %206 = vmatpush2.bf16.msra.mxu0 %v157
  %207 = vmatprep.subr.bf16.mxu0 0
  %208 = vmatpush2.bf16.msra.mxu0 %v156
  %209 = vmatprep.subr.bf16.mxu0 0
  %210 = vmatpush2.bf16.msra.mxu0 %v155
  %211 = vmatprep.mubr.bf16.mxu0 %v76
  %212 = vmatmul.mubr.bf16.gmra.mxu0 %v75
  %v213 = vpop.f32.mrf.mxu0
  %v214 = vadd.f32 0.0, %v213
  %v215 = vpop.f32.mrf.mxu0
  %v216 = vpop.f32.mrf.mxu0
  %v217 = vadd.f32 0.0, %v216
  %v218 = vpop.f32.mrf.mxu0
  %219 = vmatprep.mubr.bf16.mxu0 %v78
  %220 = vmatmul.mubr.bf16.gmra.mxu0 %v77
  %v221 = vpop.f32.mrf.mxu0
  %v222 = vadd.f32 0.0, %v221
  %v223 = vpop.f32.mrf.mxu0
  %v224 = vpop.f32.mrf.mxu0
  %v225 = vadd.f32 0.0, %v224
  %v226 = vpop.f32.mrf.mxu0
  %227 = vdwg.mxu0
  %v228 = vadd.f32 %v23, %v214
  %v229 = vadd.f32 %v24, %v217
  %v230 = vadd.f32 %v25, %v222
  %v231 = vadd.f32 %v26, %v225
  %vm232 = vcmask 261120
  %233 = vst.msk [vmem:[#allocation2] sm:$0xff] %vm232, %v228
  %234 = vst.msk [vmem:[#allocation2 + $0x8] sm:$0xff] %vm232, %v229
  %235 = vst.msk [vmem:[#allocation2 + $0x10] sm:$0xff] %vm232, %v230
  %236 = vst.msk [vmem:[#allocation2 + $0x18] sm:$0xff] %vm232, %v231
  // Predicated region
  $region14: #{_lambda_.8} parent=0 // pred_check
    %p237 = pneg %p14
  $region15: #{_lambda_.8} parent=0 // pred_check_branch
    %239 = sbr.rel (%p237) target = $region17
  $region16: #{_lambda_.8} parent=0 // pred_region
    %v240 = vld [vmem:[#allocation2] sm:$0xff]
    %v241 = vld [vmem:[#allocation2 + $0x8] sm:$0xff]
    %v242 = vld [vmem:[#allocation2 + $0x10] sm:$0xff]
    %v243 = vld [vmem:[#allocation2 + $0x18] sm:$0xff]
    %v244 = vpack.c.bf16 %v241, %v240
    %v245 = vpack.c.bf16 %v243, %v242
    %v248 = vunpack.c.l.b16 %v244
    %v249 = vunpack.c.h.b16 %v244
    %v250 = vunpack.c.l.b16 %v245
    %v251 = vunpack.c.h.b16 %v245
    %v252 = vpack.c.b16 %v248, %v248
    %v253 = vpack.c.b16 %v249, %v249
    %v254 = vpack.c.b16 %v250, %v250
    %v255 = vpack.c.b16 %v251, %v251
    %vm260 = vcmask 257024
    %261 = vst.msk [vmem:[%s2] sm:$0xf] %vm260, %v252
    %262 = vst.msk [vmem:[%s2 + $0x4] sm:$0xf] %vm260, %v253
    %263 = vst.msk [vmem:[%s2 + $0x8] sm:$0xf] %vm260, %v254
    %264 = vst.msk [vmem:[%s2 + $0xc] sm:$0xf] %vm260, %v255
    %v265 = vsel %vm232, %v240, 0.0
    %v266 = vsel %vm232, %v241, 0.0
    %v267 = vadd.f32 %v265, %v266
    %v268 = vsel %vm232, %v242, 0.0
    %v269 = vadd.f32 %v267, %v268
    %v270 = vsel %vm232, %v243, 0.0
    %v271 = vadd.f32 %v269, %v270
    %v272 = vrot.slane %v271, 4
    %v273 = vadd.f32 %v271, %v272
    %v274 = vrot.slane %v273, 2
    %v275 = vadd.f32 %v273, %v274
    %v276 = vrot.slane %v275, 1
    %v277 = vadd.f32 %v275, %v276
    %v278 = vmul.f32 %v240, %v240
    %v279 = vmul.f32 %v241, %v241
    %v280 = vmul.f32 %v242, %v242
    %v281 = vmul.f32 %v243, %v243
    %v282 = vsel %vm232, %v278, 0.0
    %v283 = vsel %vm232, %v279, 0.0
    %v284 = vadd.f32 %v282, %v283
    %v285 = vsel %vm232, %v280, 0.0
    %v286 = vadd.f32 %v284, %v285
    %v287 = vsel %vm232, %v281, 0.0
    %v288 = vadd.f32 %v286, %v287
    %v289 = vrot.slane %v288, 4
    %v290 = vadd.f32 %v288, %v289
    %v291 = vrot.slane %v290, 2
    %v292 = vadd.f32 %v290, %v291
    %v293 = vrot.slane %v292, 1
    %v294 = vadd.f32 %v292, %v293
    %vm295 = vcmask 1040384
    %v296 = vsel %vm295, %v277, %v294
    %vm297 = vcmask 254976
    %298 = vst.msk [vmem:[%s3] sm:$0x3] %vm297, %v296
  $region17: #{_lambda_.8} parent=0 // pred_fallthru
    _
  // Predicated region
  $region18: #{_lambda_.8} parent=0 // pred_check
    _
  $region19: #{_lambda_.8} parent=0 // pred_check_branch
    %300 = sbr.rel (0) target = $region21
  $region20: #{_lambda_.8} parent=0 // pred_region
    _
  $region21: #{_lambda_.8} parent=0 // pred_fallthru
    _
  // Predicated region
  $region22: #{_lambda_.8} parent=0 // pred_check
    _
  $region23: #{_lambda_.8} parent=0 // pred_check_branch
    %302 = sbr.rel (0) target = $region25
  $region24: #{_lambda_.8} parent=0 // pred_region
    _
  $region25: #{_lambda_.8} parent=0 // pred_fallthru
    _
  // Predicated region
  $region26: #{_lambda_.8} parent=0 // pred_check
    _
  $region27: #{_lambda_.8} parent=0 // pred_check_branch
    %304 = sbr.rel (0) target = $region29
  $region28: #{_lambda_.8} parent=0 // pred_region
    _
  $region29: #{_lambda_.8} parent=0 // pred_fallthru
    _
  // Predicated region
  $region30: #{_lambda_.8} parent=0 // pred_check
    _
  $region31: #{_lambda_.8} parent=0 // pred_check_branch
    %306 = sbr.rel (0) target = $region33
  $region32: #{_lambda_.8} parent=0 // pred_region
    _
  $region33: #{_lambda_.8} parent=0 // pred_fallthru
    _

</llo_original>
